<compile_context>
chip_gen: v7x
topology: tpu7x:2x2x1
jax: 0.10.0
libtpu: 0.0.40
codegen_flags: <defaults>
</compile_context>

<pallas_src>
import jax
import jax.numpy as jnp
import numpy as np
from jax.experimental import pallas as pl
from jax.experimental.pallas import tpu as pltpu

D_MODEL = 32
D_FF = 4 * D_MODEL               # 128
N_HEADS = 4
HEAD_DIM = D_MODEL // N_HEADS    # 8
CTX_DIM = 40
LN_EPS = 1e-5
QKV_COLS = 2 * HEAD_DIM + D_MODEL    # 48 lanes per head: [q | k | v@Wo]

# lane offsets inside the packed bias slab (conv1 bias first so the 128-wide
# row is 128-lane aligned)
_B_C1 = 0
_B_BO = _B_C1 + D_FF             # 128
_B_LN1G = _B_BO + D_MODEL        # 160
_B_LN1B = _B_LN1G + D_MODEL      # 192
_B_LN2G = _B_LN1B + D_MODEL      # 224
_B_LN2B = _B_LN2G + D_MODEL      # 256
_B_TOT = _B_LN2B + D_MODEL       # 288


def _layer_norm(z, g, b):
    mu = jnp.mean(z, axis=-1, keepdims=True)
    zc = z - mu
    var = jnp.mean(zc * zc, axis=-1, keepdims=True)
    return zc * jax.lax.rsqrt(var + LN_EPS) * g + b


def encoder_layer_kernel(
    x_ref,        # (1, L, D)
    ctxp_ref,     # (1, 1, D)   ctx@W_ctx + b_ctx + c2_b@W_y  (constant over L)
    qkvwb_ref,    # (H, D+1, QKV_COLS)  rows 0..D-1 = [Wq*s | Wk | Wv@Wo], row D = bias
    wslab_ref,    # (D, 2*D_FF) = [conv1_w | (conv2_w @ ctx_proj_w_y).T]
    bslab_ref,    # (1, 288)    = [c1_b | b_o | ln1_g | ln1_b | ln2_g | ln2_b]
    out_ref,      # (1, L, D)
    attn_ref,     # (1, H, L, L)
):
    x = x_ref[0]                                    # (L, D)
    ctx_add = ctxp_ref[0]                           # (1, D)
    L = x.shape[0]

    # ---- unpack parameter slabs (static slices, once per grid step) ---------
    w_qkv = qkvwb_ref[:, :D_MODEL, :]               # (H, D, 48)
    b_qkv = qkvwb_ref[:, D_MODEL:D_MODEL + 1, :]    # (H, 1, 48)
    c1_w = wslab_ref[:, 0:D_FF]                     # (D, D_FF)
    c2y_wT = wslab_ref[:, D_FF:2 * D_FF]            # (D, D_FF)  == (c2_w @ w_y).T
    c1_b = bslab_ref[:, _B_C1:_B_C1 + D_FF]
    b_o = bslab_ref[:, _B_BO:_B_BO + D_MODEL]
    ln1_g = bslab_ref[:, _B_LN1G:_B_LN1G + D_MODEL]
    ln1_b = bslab_ref[:, _B_LN1B:_B_LN1B + D_MODEL]
    ln2_g = bslab_ref[:, _B_LN2G:_B_LN2G + D_MODEL]
    ln2_b = bslab_ref[:, _B_LN2B:_B_LN2B + D_MODEL]

    # ---- multi-head self attention (heads batched on the leading dim) -------
    xb = jnp.broadcast_to(x[None, :, :], (N_HEADS, L, D_MODEL))          # (H, L, D)
    qkv = jnp.einsum('hlc,hcd->hld', xb, w_qkv,
                     preferred_element_type=jnp.float32) + b_qkv          # (H, L, 48)
    q = qkv[:, :, 0:HEAD_DIM]                         # already scaled by 1/sqrt(Hd)
    k = qkv[:, :, HEAD_DIM:2 * HEAD_DIM]
    vp = qkv[:, :, 2 * HEAD_DIM:QKV_COLS]             # (H, L, D): V@Wo already applied

    s = jnp.einsum('hld,hmd->hlm', q, k,
                   preferred_element_type=jnp.float32)                    # (H, L, L)
    s = s - jnp.max(s, axis=-1, keepdims=True)
    e = jnp.exp(s)
    a = e * pl.reciprocal(jnp.sum(e, axis=-1, keepdims=True), approx=True)
    attn_ref[0] = a                                                       # single store

    ao = jnp.einsum('hlm,hmd->hld', a, vp,
                    preferred_element_type=jnp.float32)                   # (H, L, D)
    new_x = b_o + ao[0]
    for hh in range(1, N_HEADS):                      # sum heads == concat + Wo matmul
        new_x = new_x + ao[hh]                                            # (L, D)

    # ---- residual + norm1 (dropout == identity at inference) ----------------
    x1 = x + new_x
    xn = _layer_norm(x1, ln1_g, ln1_b)

    # ---- 1x1-conv FFN fused with ctx_projection's y-part --------------------
    hfeat = jnp.dot(xn, c1_w, preferred_element_type=jnp.float32) + c1_b
    hfeat = jnp.maximum(hfeat, 0.0)                                       # relu
    # (relu(h) @ c2_w + c2_b) @ w_y + ctx@w_c + b  ==  relu(h)@(c2_w@w_y) + ctx_add
    y = jnp.einsum('lf,df->ld', hfeat, c2y_wT,
                   preferred_element_type=jnp.float32) + ctx_add

    # ---- residual + norm2 ----------------------------------------------------
    out_ref[0] = _layer_norm(xn + y, ln2_g, ln2_b)


def encoder_layer(x, ctx, params):
    (wq, bq, wk, bk, wv, bv, wo, bo, g1, be1,
     c1w, c1b, c2w, c2b, cwy, cwc, cb, g2, be2) = params
    B, L, D = x.shape
    assert D == D_MODEL

    scale = 1.0 / (HEAD_DIM ** 0.5)

    # ---- wrapper-side parameter repacking / folding (pure layout + tiny
    #      constant matmuls, done once) ----------------------------------------
    def per_head_w(w):   # (D, D) -> (H, D, Hd)
        return w.reshape(D_MODEL, N_HEADS, HEAD_DIM).transpose(1, 0, 2)

    def per_head_b(b):   # (1, D) -> (H, 1, Hd)
        return b.reshape(N_HEADS, HEAD_DIM)[:, None, :]

    wq_h = per_head_w(wq) * scale                                         # scale folded
    bq_h = per_head_b(bq) * scale
    wk_h = per_head_w(wk)
    bk_h = per_head_b(bk)
    wo_h = wo.reshape(N_HEADS, HEAD_DIM, D_MODEL)                         # (H, Hd, D)
    # fold the output projection into the value weights (exact):
    #   (x@Wv_h + bv_h) @ Wo_h == x @ (Wv_h@Wo_h) + bv_h@Wo_h
    wvo_h = jnp.einsum('hcd,hde->hce', per_head_w(wv), wo_h)              # (H, D, D)
    bvo_h = jnp.einsum('hxd,hde->hxe', per_head_b(bv), wo_h)              # (H, 1, D)

    w_all = jnp.concatenate([wq_h, wk_h, wvo_h], axis=-1)                 # (H, D, 48)
    b_all = jnp.concatenate([bq_h, bk_h, bvo_h], axis=-1)                 # (H, 1, 48)
    qkv_wb = jnp.concatenate([w_all, b_all], axis=1)                      # (H, D+1, 48)

    # fold conv2 with ctx_projection's y-part:  h@c2w@cwy == h@(c2w@cwy)
    c2cy_w = c2w @ cwy                                                    # (D_FF, D)
    w_slab = jnp.concatenate([c1w, c2cy_w.T], axis=1)                     # (D, 2*D_FF)

    b_slab = jnp.concatenate([c1b, bo, g1, be1, g2, be2], axis=1)         # (1, 288)

    # ctx_projection's ctx half + bias + folded conv2 bias: constant over L,
    # so one tiny matmul here per batch; nothing of size L x 40 ever hits HBM.
    ctx_add = (ctx.astype(jnp.float32) @ cwc + cb + c2b @ cwy)[:, None, :]  # (B, 1, D)

    in_specs = [
        pl.BlockSpec((1, L, D), lambda b: (b, 0, 0)),
        pl.BlockSpec((1, 1, D), lambda b: (b, 0, 0)),
        pl.BlockSpec((N_HEADS, D_MODEL + 1, QKV_COLS), lambda b: (0, 0, 0)),
        pl.BlockSpec((D_MODEL, 2 * D_FF), lambda b: (0, 0)),
        pl.BlockSpec((1, _B_TOT), lambda b: (0, 0)),
    ]
    out_specs = [
        pl.BlockSpec((1, L, D), lambda b: (b, 0, 0)),
        pl.BlockSpec((1, N_HEADS, L, L), lambda b: (b, 0, 0, 0)),
    ]
    out_shape = [
        jax.ShapeDtypeStruct((B, L, D), jnp.float32),
        jax.ShapeDtypeStruct((B, N_HEADS, L, L), jnp.float32),
    ]
    return pl.pallas_call(
        encoder_layer_kernel,
        out_shape=out_shape,
        grid_spec=pltpu.PrefetchScalarGridSpec(
            num_scalar_prefetch=0,
            grid=(B,),                       # B>=2 keeps both v7x TensorCores busy
            in_specs=in_specs,
            out_specs=out_specs,
        ),
        compiler_params=pltpu.CompilerParams(dimension_semantics=("parallel",)),
    )(x, ctx_add, qkv_wb, w_slab, b_slab)


def init_params(key):
    ks = jax.random.split(key, 32)
    i = iter(range(32))

    def w(shape, scale=0.05):
        return jax.random.normal(ks[next(i)], shape, jnp.float32) * scale

    params = [
        w((D_MODEL, D_MODEL)), w((1, D_MODEL)),                 # Wq, bq
        w((D_MODEL, D_MODEL)), w((1, D_MODEL)),                 # Wk, bk
        w((D_MODEL, D_MODEL)), w((1, D_MODEL)),                 # Wv, bv
        w((D_MODEL, D_MODEL)), w((1, D_MODEL)),                 # Wo, bo
        1.0 + w((1, D_MODEL), 0.01), w((1, D_MODEL), 0.01),     # LayerNorm1 gamma/beta
        w((D_MODEL, D_FF)), w((1, D_FF)),                       # conv1 (1x1) weight.T, bias
        w((D_FF, D_MODEL)), w((1, D_MODEL)),                    # conv2 (1x1) weight.T, bias
        w((D_MODEL, D_MODEL)), w((CTX_DIM, D_MODEL)),           # ctx_projection W split (y / ctx)
        w((1, D_MODEL)),                                        # ctx_projection bias
        1.0 + w((1, D_MODEL), 0.01), w((1, D_MODEL), 0.01),     # LayerNorm2 gamma/beta
    ]
    return params


def reference(x, ctx, params):
    (wq, bq, wk, bk, wv, bv, wo, bo, g1, be1,
     c1w, c1b, c2w, c2b, cwy, cwc, cb, g2, be2) = params
    B, L, D = x.shape
    ctx_bl = jnp.broadcast_to(ctx[:, None, :], (B, L, CTX_DIM))
    q = x @ wq + bq
    k = x @ wk + bk
    v = x @ wv + bv
    qh = q.reshape(B, L, N_HEADS, HEAD_DIM).transpose(0, 2, 1, 3)
    kh = k.reshape(B, L, N_HEADS, HEAD_DIM).transpose(0, 2, 1, 3)
    vh = v.reshape(B, L, N_HEADS, HEAD_DIM).transpose(0, 2, 1, 3)
    scores = jnp.einsum('bhld,bhmd->bhlm', qh, kh) / (HEAD_DIM ** 0.5)
    a = jax.nn.softmax(scores, axis=-1)
    o = jnp.einsum('bhlm,bhmd->bhld', a, vh).transpose(0, 2, 1, 3).reshape(B, L, D)
    x1 = x + (o @ wo + bo)

    def ln(z, g, b):
        mu = z.mean(-1, keepdims=True)
        var = ((z - mu) ** 2).mean(-1, keepdims=True)
        return (z - mu) / jnp.sqrt(var + LN_EPS) * g + b

    xn = ln(x1, g1, be1)
    h = jax.nn.relu(xn @ c1w + c1b)
    y = h @ c2w + c2b
    y = y @ cwy + ctx_bl @ cwc + cb
    return ln(xn + y, g2, be2), a


if __name__ == "__main__":
    key = jax.random.PRNGKey(0)
    kx, kc, kp = jax.random.split(key, 3)

    B, L = 2, 8
    x = jax.random.normal(kx, (B, L, D_MODEL), jnp.float32)
    outputs_ctx_tf = jax.random.normal(kc, (B, CTX_DIM), jnp.float32)
    params = init_params(kp)

    out, attn = encoder_layer(x, outputs_ctx_tf, params)
    jax.block_until_ready((out, attn))

    ref_out, ref_attn = reference(x, outputs_ctx_tf, params)
    np.testing.assert_allclose(np.asarray(out), np.asarray(ref_out), rtol=1e-2, atol=1e-2)
    np.testing.assert_allclose(np.asarray(attn), np.asarray(ref_attn), rtol=1e-2, atol=1e-2)

    print("KERNEL_OK")
</pallas_src>

<mosaic_0001>
module attributes {stable_mosaic.version = 11 : i64} {
  func.func @encoder_layer_kernel(%arg0: i32, %arg1: memref<1x8x32xf32, #tpu.memory_space<vmem>>, %arg2: memref<1x1x32xf32, #tpu.memory_space<vmem>>, %arg3: memref<4x33x48xf32, #tpu.memory_space<vmem>>, %arg4: memref<32x256xf32, #tpu.memory_space<vmem>>, %arg5: memref<1x288xf32, #tpu.memory_space<vmem>>, %arg6: memref<1x8x32xf32, #tpu.memory_space<vmem>>, %arg7: memref<1x4x8x8xf32, #tpu.memory_space<vmem>>) attributes {dimension_semantics = [#tpu.dimension_semantics<parallel>], iteration_bounds = array<i64: 2>, scalar_prefetch = 0 : i64, scratch_operands = 0 : i64, tpu.core_type = #tpu.core_type<tc>, window_params = [{transform_indices = @transform_0, window_bounds = array<i64: 1, 8, 32>}, {transform_indices = @transform_1, window_bounds = array<i64: 1, 1, 32>}, {pipeline_mode = #tpu.pipeline_mode<synchronous>, transform_indices = @transform_2, window_bounds = array<i64: 4, 33, 48>}, {pipeline_mode = #tpu.pipeline_mode<synchronous>, transform_indices = @transform_3, window_bounds = array<i64: 32, 256>}, {pipeline_mode = #tpu.pipeline_mode<synchronous>, transform_indices = @transform_4, window_bounds = array<i64: 1, 288>}, {transform_indices = @transform_5, window_bounds = array<i64: 1, 8, 32>}, {transform_indices = @transform_6, window_bounds = array<i64: 1, 4, 8, 8>}]} {
    %c0 = arith.constant 0 : index
    %c0_0 = arith.constant 0 : index
    %c0_1 = arith.constant 0 : index
    %0 = vector.load %arg1[%c0, %c0_0, %c0_1] : memref<1x8x32xf32, #tpu.memory_space<vmem>>, vector<1x8x32xf32>
    %1 = vector.shape_cast %0 : vector<1x8x32xf32> to vector<8x32xf32>
    %c0_2 = arith.constant 0 : index
    %c0_3 = arith.constant 0 : index
    %c0_4 = arith.constant 0 : index
    %2 = vector.load %arg2[%c0_2, %c0_3, %c0_4] : memref<1x1x32xf32, #tpu.memory_space<vmem>>, vector<1x1x32xf32>
    %3 = vector.shape_cast %2 : vector<1x1x32xf32> to vector<1x32xf32>
    %c0_5 = arith.constant 0 : index
    %c0_6 = arith.constant 0 : index
    %c0_7 = arith.constant 0 : index
    %4 = vector.load %arg3[%c0_5, %c0_6, %c0_7] : memref<4x33x48xf32, #tpu.memory_space<vmem>>, vector<4x32x48xf32>
    %c0_8 = arith.constant 0 : index
    %c32 = arith.constant 32 : index
    %c0_9 = arith.constant 0 : index
    %5 = vector.load %arg3[%c0_8, %c32, %c0_9] : memref<4x33x48xf32, #tpu.memory_space<vmem>>, vector<4x1x48xf32>
    %c0_10 = arith.constant 0 : index
    %c0_11 = arith.constant 0 : index
    %6 = vector.load %arg4[%c0_10, %c0_11] : memref<32x256xf32, #tpu.memory_space<vmem>>, vector<32x128xf32>
    %c0_12 = arith.constant 0 : index
    %c128 = arith.constant 128 : index
    %7 = vector.load %arg4[%c0_12, %c128] : memref<32x256xf32, #tpu.memory_space<vmem>>, vector<32x128xf32>
    %c0_13 = arith.constant 0 : index
    %c0_14 = arith.constant 0 : index
    %8 = vector.load %arg5[%c0_13, %c0_14] : memref<1x288xf32, #tpu.memory_space<vmem>>, vector<1x128xf32>
    %c0_15 = arith.constant 0 : index
    %c128_16 = arith.constant 128 : index
    %9 = vector.load %arg5[%c0_15, %c128_16] : memref<1x288xf32, #tpu.memory_space<vmem>>, vector<1x32xf32>
    %c0_17 = arith.constant 0 : index
    %c160 = arith.constant 160 : index
    %10 = vector.load %arg5[%c0_17, %c160] : memref<1x288xf32, #tpu.memory_space<vmem>>, vector<1x32xf32>
    %c0_18 = arith.constant 0 : index
    %c192 = arith.constant 192 : index
    %11 = vector.load %arg5[%c0_18, %c192] : memref<1x288xf32, #tpu.memory_space<vmem>>, vector<1x32xf32>
    %c0_19 = arith.constant 0 : index
    %c224 = arith.constant 224 : index
    %12 = vector.load %arg5[%c0_19, %c224] : memref<1x288xf32, #tpu.memory_space<vmem>>, vector<1x32xf32>
    %c0_20 = arith.constant 0 : index
    %c256 = arith.constant 256 : index
    %13 = vector.load %arg5[%c0_20, %c256] : memref<1x288xf32, #tpu.memory_space<vmem>>, vector<1x32xf32>
    %14 = vector.shape_cast %1 : vector<8x32xf32> to vector<1x8x32xf32>
    %15 = vector.shape_cast %14 : vector<1x8x32xf32> to vector<1x8x32xf32>
    %16 = vector.broadcast %15 : vector<1x8x32xf32> to vector<4x8x32xf32>
    "tpu.trace_start"() <{level = 10 : i32, message = "hlc,hcd->hld"}> : () -> ()
    %cst = arith.constant dense<0.000000e+00> : vector<4x8x48xf32>
    %17 = tpu.matmul %16, %4, %cst {dimension_numbers = #tpu.dot_dimension_numbers<[2], [1], [1], [2], [0, 0, 0, 1, 1, 2], [0], [0]>} : vector<4x8x32xf32>, vector<4x32x48xf32>, vector<4x8x48xf32> -> vector<4x8x48xf32>
    "tpu.trace_stop"() : () -> ()
    %18 = vector.broadcast %5 : vector<4x1x48xf32> to vector<4x8x48xf32>
    %19 = arith.addf %17, %18 : vector<4x8x48xf32>
    %20 = vector.extract_strided_slice %19 {offsets = [0, 0, 0], sizes = [4, 8, 8], strides = [1, 1, 1]} : vector<4x8x48xf32> to vector<4x8x8xf32>
    %21 = vector.extract_strided_slice %19 {offsets = [0, 0, 8], sizes = [4, 8, 8], strides = [1, 1, 1]} : vector<4x8x48xf32> to vector<4x8x8xf32>
    %22 = vector.extract_strided_slice %19 {offsets = [0, 0, 16], sizes = [4, 8, 32], strides = [1, 1, 1]} : vector<4x8x48xf32> to vector<4x8x32xf32>
    "tpu.trace_start"() <{level = 10 : i32, message = "hld,hmd->hlm"}> : () -> ()
    %cst_21 = arith.constant dense<0.000000e+00> : vector<4x8x8xf32>
    %23 = tpu.matmul %20, %21, %cst_21 {dimension_numbers = #tpu.dot_dimension_numbers<[2], [2], [1], [1], [0, 0, 0, 1, 1, 1], [0], [0]>} : vector<4x8x8xf32>, vector<4x8x8xf32>, vector<4x8x8xf32> -> vector<4x8x8xf32>
    "tpu.trace_stop"() : () -> ()
    %cst_22 = arith.constant dense<0xFF800000> : vector<4x8xf32>
    %24 = vector.multi_reduction <maximumf>, %23, %cst_22 [2] : vector<4x8x8xf32> to vector<4x8xf32>
    %25 = vector.shape_cast %24 : vector<4x8xf32> to vector<4x8x1xf32>
    %26 = vector.broadcast %25 : vector<4x8x1xf32> to vector<4x8x8xf32>
    %27 = arith.subf %23, %26 : vector<4x8x8xf32>
    %28 = math.exp %27 : vector<4x8x8xf32>
    %cst_23 = arith.constant dense<0.000000e+00> : vector<4x8xf32>
    %29 = vector.multi_reduction <add>, %28, %cst_23 [2] : vector<4x8x8xf32> to vector<4x8xf32>
    %30 = vector.shape_cast %29 : vector<4x8xf32> to vector<4x8x1xf32>
    %31 = tpu.reciprocal %30 {approx = true} : vector<4x8x1xf32> -> vector<4x8x1xf32>
    %32 = vector.broadcast %31 : vector<4x8x1xf32> to vector<4x8x8xf32>
    %33 = arith.mulf %28, %32 : vector<4x8x8xf32>
    %c0_24 = arith.constant 0 : index
    %c0_25 = arith.constant 0 : index
    %c0_26 = arith.constant 0 : index
    %c0_27 = arith.constant 0 : index
    %34 = vector.load %arg7[%c0_24, %c0_25, %c0_26, %c0_27] : memref<1x4x8x8xf32, #tpu.memory_space<vmem>>, vector<1x4x8x8xf32>
    %35 = vector.shape_cast %34 : vector<1x4x8x8xf32> to vector<4x8x8xf32>
    %36 = vector.shape_cast %33 : vector<4x8x8xf32> to vector<1x4x8x8xf32>
    tpu.vector_store %arg7[%c0_24, %c0_25, %c0_26, %c0_27], %36 {strides = array<i32>} : memref<1x4x8x8xf32, #tpu.memory_space<vmem>>, vector<1x4x8x8xf32>,
    "tpu.trace_start"() <{level = 10 : i32, message = "hlm,hmd->hld"}> : () -> ()
    %cst_28 = arith.constant dense<0.000000e+00> : vector<4x8x32xf32>
    %37 = tpu.matmul %33, %22, %cst_28 {dimension_numbers = #tpu.dot_dimension_numbers<[2], [1], [1], [2], [0, 0, 0, 1, 1, 2], [0], [0]>} : vector<4x8x8xf32>, vector<4x8x32xf32>, vector<4x8x32xf32> -> vector<4x8x32xf32>
    "tpu.trace_stop"() : () -> ()
    %38 = vector.extract_strided_slice %37 {offsets = [0, 0, 0], sizes = [1, 8, 32], strides = [1, 1, 1]} : vector<4x8x32xf32> to vector<1x8x32xf32>
    %39 = vector.shape_cast %38 : vector<1x8x32xf32> to vector<8x32xf32>
    %40 = vector.broadcast %9 : vector<1x32xf32> to vector<8x32xf32>
    %41 = arith.addf %40, %39 : vector<8x32xf32>
    %42 = vector.extract_strided_slice %37 {offsets = [1, 0, 0], sizes = [1, 8, 32], strides = [1, 1, 1]} : vector<4x8x32xf32> to vector<1x8x32xf32>
    %43 = vector.shape_cast %42 : vector<1x8x32xf32> to vector<8x32xf32>
    %44 = arith.addf %41, %43 : vector<8x32xf32>
    %45 = vector.extract_strided_slice %37 {offsets = [2, 0, 0], sizes = [1, 8, 32], strides = [1, 1, 1]} : vector<4x8x32xf32> to vector<1x8x32xf32>
    %46 = vector.shape_cast %45 : vector<1x8x32xf32> to vector<8x32xf32>
    %47 = arith.addf %44, %46 : vector<8x32xf32>
    %48 = vector.extract_strided_slice %37 {offsets = [3, 0, 0], sizes = [1, 8, 32], strides = [1, 1, 1]} : vector<4x8x32xf32> to vector<1x8x32xf32>
    %49 = vector.shape_cast %48 : vector<1x8x32xf32> to vector<8x32xf32>
    %50 = arith.addf %47, %49 : vector<8x32xf32>
    %51 = arith.addf %1, %50 : vector<8x32xf32>
    %cst_29 = arith.constant dense<0.000000e+00> : vector<8xf32>
    %52 = vector.multi_reduction <add>, %51, %cst_29 [1] : vector<8x32xf32> to vector<8xf32>
    %53 = vector.shape_cast %52 : vector<8xf32> to vector<8x1xf32>
    %cst_30 = arith.constant 3.200000e+01 : f32
    %54 = vector.broadcast %cst_30 : f32 to vector<8x1xf32>
    %55 = arith.divf %53, %54 : vector<8x1xf32>
    %56 = vector.broadcast %55 : vector<8x1xf32> to vector<8x32xf32>
    %57 = arith.subf %51, %56 : vector<8x32xf32>
    %58 = arith.mulf %57, %57 : vector<8x32xf32>
    %cst_31 = arith.constant dense<0.000000e+00> : vector<8xf32>
    %59 = vector.multi_reduction <add>, %58, %cst_31 [1] : vector<8x32xf32> to vector<8xf32>
    %60 = vector.shape_cast %59 : vector<8xf32> to vector<8x1xf32>
    %cst_32 = arith.constant 3.200000e+01 : f32
    %61 = vector.broadcast %cst_32 : f32 to vector<8x1xf32>
    %62 = arith.divf %60, %61 : vector<8x1xf32>
    %cst_33 = arith.constant 9.99999974E-6 : f32
    %63 = vector.broadcast %cst_33 : f32 to vector<8x1xf32>
    %64 = arith.addf %62, %63 : vector<8x1xf32>
    %65 = math.rsqrt %64 : vector<8x1xf32>
    %66 = vector.broadcast %65 : vector<8x1xf32> to vector<8x32xf32>
    %67 = arith.mulf %57, %66 : vector<8x32xf32>
    %68 = vector.broadcast %10 : vector<1x32xf32> to vector<8x32xf32>
    %69 = arith.mulf %67, %68 : vector<8x32xf32>
    %70 = vector.broadcast %11 : vector<1x32xf32> to vector<8x32xf32>
    %71 = arith.addf %69, %70 : vector<8x32xf32>
    %cst_34 = arith.constant dense<0.000000e+00> : vector<8x128xf32>
    %72 = tpu.matmul %71, %6, %cst_34 {dimension_numbers = #tpu.dot_dimension_numbers<[1], [0], [0], [1], [0, 0, 1, 1], [], []>} : vector<8x32xf32>, vector<32x128xf32>, vector<8x128xf32> -> vector<8x128xf32>
    %73 = vector.broadcast %8 : vector<1x128xf32> to vector<8x128xf32>
    %74 = arith.addf %72, %73 : vector<8x128xf32>
    %cst_35 = arith.constant 0.000000e+00 : f32
    %75 = vector.broadcast %cst_35 : f32 to vector<8x128xf32>
    %76 = arith.maximumf %74, %75 : vector<8x128xf32>
    "tpu.trace_start"() <{level = 10 : i32, message = "lf,df->ld"}> : () -> ()
    %cst_36 = arith.constant dense<0.000000e+00> : vector<8x32xf32>
    %77 = tpu.matmul %76, %7, %cst_36 {dimension_numbers = #tpu.dot_dimension_numbers<[1], [1], [0], [0], [0, 0, 1, 0], [], []>} : vector<8x128xf32>, vector<32x128xf32>, vector<8x32xf32> -> vector<8x32xf32>
    "tpu.trace_stop"() : () -> ()
    %78 = vector.broadcast %3 : vector<1x32xf32> to vector<8x32xf32>
    %79 = arith.addf %77, %78 : vector<8x32xf32>
    %80 = arith.addf %71, %79 : vector<8x32xf32>
    %cst_37 = arith.constant dense<0.000000e+00> : vector<8xf32>
    %81 = vector.multi_reduction <add>, %80, %cst_37 [1] : vector<8x32xf32> to vector<8xf32>
    %82 = vector.shape_cast %81 : vector<8xf32> to vector<8x1xf32>
    %cst_38 = arith.constant 3.200000e+01 : f32
    %83 = vector.broadcast %cst_38 : f32 to vector<8x1xf32>
    %84 = arith.divf %82, %83 : vector<8x1xf32>
    %85 = vector.broadcast %84 : vector<8x1xf32> to vector<8x32xf32>
    %86 = arith.subf %80, %85 : vector<8x32xf32>
    %87 = arith.mulf %86, %86 : vector<8x32xf32>
    %cst_39 = arith.constant dense<0.000000e+00> : vector<8xf32>
    %88 = vector.multi_reduction <add>, %87, %cst_39 [1] : vector<8x32xf32> to vector<8xf32>
    %89 = vector.shape_cast %88 : vector<8xf32> to vector<8x1xf32>
    %cst_40 = arith.constant 3.200000e+01 : f32
    %90 = vector.broadcast %cst_40 : f32 to vector<8x1xf32>
    %91 = arith.divf %89, %90 : vector<8x1xf32>
    %cst_41 = arith.constant 9.99999974E-6 : f32
    %92 = vector.broadcast %cst_41 : f32 to vector<8x1xf32>
    %93 = arith.addf %91, %92 : vector<8x1xf32>
    %94 = math.rsqrt %93 : vector<8x1xf32>
    %95 = vector.broadcast %94 : vector<8x1xf32> to vector<8x32xf32>
    %96 = arith.mulf %86, %95 : vector<8x32xf32>
    %97 = vector.broadcast %12 : vector<1x32xf32> to vector<8x32xf32>
    %98 = arith.mulf %96, %97 : vector<8x32xf32>
    %99 = vector.broadcast %13 : vector<1x32xf32> to vector<8x32xf32>
    %100 = arith.addf %98, %99 : vector<8x32xf32>
    %c0_42 = arith.constant 0 : index
    %c0_43 = arith.constant 0 : index
    %c0_44 = arith.constant 0 : index
    %101 = vector.load %arg6[%c0_42, %c0_43, %c0_44] : memref<1x8x32xf32, #tpu.memory_space<vmem>>, vector<1x8x32xf32>
    %102 = vector.shape_cast %101 : vector<1x8x32xf32> to vector<8x32xf32>
    %103 = vector.shape_cast %100 : vector<8x32xf32> to vector<1x8x32xf32>
    tpu.vector_store %arg6[%c0_42, %c0_43, %c0_44], %103 {strides = array<i32>} : memref<1x8x32xf32, #tpu.memory_space<vmem>>, vector<1x8x32xf32>,
    return
  }
  func.func @transform_0(%arg0: i32) -> (i32, i32, i32) {
    %c0_i32 = arith.constant 0 : i32
    %c0_i32_0 = arith.constant 0 : i32
    %c0_i32_1 = arith.constant 0 : i32
    return %arg0, %c0_i32, %c0_i32_0 : i32, i32, i32
  }
  func.func @transform_1(%arg0: i32) -> (i32, i32, i32) {
    %c0_i32 = arith.constant 0 : i32
    %c0_i32_0 = arith.constant 0 : i32
    %c0_i32_1 = arith.constant 0 : i32
    return %arg0, %c0_i32, %c0_i32_0 : i32, i32, i32
  }
  func.func @transform_2(%arg0: i32) -> (i32, i32, i32) {
    %c0_i32 = arith.constant 0 : i32
    %c0_i32_0 = arith.constant 0 : i32
    %c0_i32_1 = arith.constant 0 : i32
    %c0_i32_2 = arith.constant 0 : i32
    return %c0_i32, %c0_i32_0, %c0_i32_1 : i32, i32, i32
  }
  func.func @transform_3(%arg0: i32) -> (i32, i32) {
    %c0_i32 = arith.constant 0 : i32
    %c0_i32_0 = arith.constant 0 : i32
    %c0_i32_1 = arith.constant 0 : i32
    return %c0_i32, %c0_i32_0 : i32, i32
  }
  func.func @transform_4(%arg0: i32) -> (i32, i32) {
    %c0_i32 = arith.constant 0 : i32
    %c0_i32_0 = arith.constant 0 : i32
    %c0_i32_1 = arith.constant 0 : i32
    return %c0_i32, %c0_i32_0 : i32, i32
  }
  func.func @transform_5(%arg0: i32) -> (i32, i32, i32) {
    %c0_i32 = arith.constant 0 : i32
    %c0_i32_0 = arith.constant 0 : i32
    %c0_i32_1 = arith.constant 0 : i32
    return %arg0, %c0_i32, %c0_i32_0 : i32, i32, i32
  }
  func.func @transform_6(%arg0: i32) -> (i32, i32, i32, i32) {
    %c0_i32 = arith.constant 0 : i32
    %c0_i32_0 = arith.constant 0 : i32
    %c0_i32_1 = arith.constant 0 : i32
    %c0_i32_2 = arith.constant 0 : i32
    return %arg0, %c0_i32, %c0_i32_0, %c0_i32_1 : i32, i32, i32, i32
  }
}

</mosaic_0001>

<llo_original>
// kernel: tpu_custom_call.1
$region0: #{tpu_custom_call.1}
  #allocation0 [shape = 'u32[]', space=smem, size = 0x4, offset = 0x4, fixed_abs, tag = 'smem constant byte address 0x4 - core index']
  #allocation1 [shape = 'u32[144,128]{1,0:T(1,128)}', space=vmem, size = 0x12000, scoped, tag = 'internal scratch']
  %s0 = inlined_call_operand.vmem [shape: f32[2,8,32], index: 0, kind: input, shape index: {}]
  %s1 = inlined_call_operand.vmem [shape: f32[2,1,32], index: 1, kind: input, shape index: {}]
  %s2 = inlined_call_operand.vmem [shape: f32[4,33,48], index: 2, kind: input, shape index: {}]
  %s3 = inlined_call_operand.vmem [shape: f32[32,256], index: 3, kind: input, shape index: {}]
  %s4 = inlined_call_operand.vmem [shape: f32[1,288], index: 4, kind: input, shape index: {}]
  %s5 = inlined_call_operand.hbm [shape: f32[2,8,32], index: 5, kind: output, shape index: {0}]
  %s6 = inlined_call_operand.hbm [shape: f32[2,4,8,8], index: 6, kind: output, shape index: {1}]
  %7 = xla_tuple %s5, %s6
  %s8 = sld [smem:[#allocation0]]
  $region61: #{tpu_custom_call.1} parent=0
    _
  %s10 = ssub.s32 1, %s8
  %s11 = scalar_select 0, %s10, %s8
  $region1: #{tpu_custom_call.1} parent=0
    #allocation2 [shape = 'u8[8192]{0}', space=vmem, size = 0x2000, scoped, tag = 'output window, operand 0']
    #allocation3 [shape = 's32[2]{0}', space=sflag, size = 0x8, scoped, tag = 'scoped memory for tpu_custom_call.1']
    #allocation4 [shape = 'u8[32768]{0}', space=vmem, size = 0x8000, scoped, tag = 'output window, operand 1']
    #allocation5 [shape = 's32[2]{0}', space=sflag, size = 0x8, scoped, tag = 'scoped memory for tpu_custom_call.1']
    %12 = vsyncpa [#allocation3], 0
    %s13 = scalar_lea.sflag [#allocation3], 1
    %14 = vsyncpa %s13, 0
    %15 = vsyncpa [#allocation5], 0
    %s16 = scalar_lea.sflag [#allocation5], 1
    %17 = vsyncpa %s16, 0
    loop: start=0, step=1, limit=4
    $region2: #{tpu_custom_call.1} parent=1 // loop_pre_header
      _
    $region3: #{tpu_custom_call.1} parent=1 // loop_header
      %s19 = sphi 0, %s23
      %p20 = scmp.ge.s32.totalorder %s19, 4
      %s29 = sphi 0, %s31
      %s32 = sphi 0, %s29
      %s33 = sphi 0, %s32
      %s49 = sphi 0, %s33
      %s55 = sphi 0, %s57
      %s58 = sphi 0, %s55
      %s59 = sphi 0, %s58
      %s75 = sphi 0, %s59
      %s79 = sphi 0, %s79
      %s81 = sphi 0, %s79
      %s82 = sphi 0, %s81
      %s96 = sphi 0, %s82
      %s100 = sphi 0, %s100
      %s102 = sphi 0, %s100
      %s103 = sphi 0, %s102
      %s117 = sphi 0, %s103
      %s121 = sphi 0, %s121
      %s123 = sphi 0, %s121
      %s124 = sphi 0, %s123
      %s138 = sphi 0, %s124
      %s144 = sphi 0, %s146
      %s147 = sphi 0, %s144
      %s148 = sphi 0, %s147
      %s164 = sphi 0, %s148
      %s170 = sphi 0, %s172
      %s173 = sphi 0, %s170
      %s174 = sphi 0, %s173
      %s190 = sphi 0, %s174
    $region4: #{tpu_custom_call.1} parent=1 // loop_header_branch
      %22 = sbr.rel (%p20) target = $region8
    $region5: #{tpu_custom_call.1} parent=1 // loop_body
      %s24 = ssub.s32 %s19, 1
      %s25 = ssub.s32 %s19, 2
      %s26 = sadd.s32 %s19, 1
      %s27 = ssub.s32 %s19, %s26
      %p28 = scmp.eq.s32.totalorder %s27, 0
      %s30 = sadd.s32 %s29, 1
      %s31 = scalar_select %p28, %s29, %s30
      %p34 = pneg %p28
      %p35 = scmp.eq.s32.totalorder %s19, 1
      %p36 = por %p34, %p35
      %p37 = scmp.ne.s32.totalorder %s29, %s32
      %p38 = scmp.eq.s32.totalorder %s19, 0
      %p39 = por %p37, %p38
      %p40 = scmp.ne.s32.totalorder %s29, %s32
      %p41 = scmp.eq.s32.totalorder %s24, 1
      %p42 = por %p40, %p41
      %p43 = scmp.ne.s32.totalorder %s32, %s33
      %p44 = scmp.eq.s32.totalorder %s24, 0
      %p45 = por %p43, %p44
      %p46 = scmp.ne.s32.totalorder %s32, %s33
      %p47 = scmp.eq.s32.totalorder %s25, 1
      %p48 = por %p46, %p47
      %p50 = scmp.ne.s32.totalorder %s33, %s49
      %p51 = scmp.eq.s32.totalorder %s25, 0
      %p52 = por %p50, %p51
      %s53 = ssub.s32 %s19, %s26
      %p54 = scmp.eq.s32.totalorder %s53, 0
      %s56 = sadd.s32 %s55, 1
      %s57 = scalar_select %p54, %s55, %s56
      %p60 = pneg %p54
      %p61 = scmp.eq.s32.totalorder %s19, 1
      %p62 = por %p60, %p61
      %p63 = scmp.ne.s32.totalorder %s55, %s58
      %p64 = scmp.eq.s32.totalorder %s19, 0
      %p65 = por %p63, %p64
      %p66 = scmp.ne.s32.totalorder %s55, %s58
      %p67 = scmp.eq.s32.totalorder %s24, 1
      %p68 = por %p66, %p67
      %p69 = scmp.ne.s32.totalorder %s58, %s59
      %p70 = scmp.eq.s32.totalorder %s24, 0
      %p71 = por %p69, %p70
      %p72 = scmp.ne.s32.totalorder %s58, %s59
      %p73 = scmp.eq.s32.totalorder %s25, 1
      %p74 = por %p72, %p73
      %p76 = scmp.ne.s32.totalorder %s59, %s75
      %p77 = scmp.eq.s32.totalorder %s25, 0
      %p78 = por %p76, %p77
      %s80 = sadd.s32 %s79, 1
      %p83 = scmp.eq.s32.totalorder %s19, 1
      %p84 = scmp.ne.s32.totalorder %s79, %s81
      %p85 = scmp.eq.s32.totalorder %s19, 0
      %p86 = por %p84, %p85
      %p87 = scmp.ne.s32.totalorder %s79, %s81
      %p88 = scmp.eq.s32.totalorder %s24, 1
      %p89 = por %p87, %p88
      %p90 = scmp.ne.s32.totalorder %s81, %s82
      %p91 = scmp.eq.s32.totalorder %s24, 0
      %p92 = por %p90, %p91
      %p93 = scmp.ne.s32.totalorder %s81, %s82
      %p94 = scmp.eq.s32.totalorder %s25, 1
      %p95 = por %p93, %p94
      %p97 = scmp.ne.s32.totalorder %s82, %s96
      %p98 = scmp.eq.s32.totalorder %s25, 0
      %p99 = por %p97, %p98
      %s101 = sadd.s32 %s100, 1
      %p104 = scmp.eq.s32.totalorder %s19, 1
      %p105 = scmp.ne.s32.totalorder %s100, %s102
      %p106 = scmp.eq.s32.totalorder %s19, 0
      %p107 = por %p105, %p106
      %p108 = scmp.ne.s32.totalorder %s100, %s102
      %p109 = scmp.eq.s32.totalorder %s24, 1
      %p110 = por %p108, %p109
      %p111 = scmp.ne.s32.totalorder %s102, %s103
      %p112 = scmp.eq.s32.totalorder %s24, 0
      %p113 = por %p111, %p112
      %p114 = scmp.ne.s32.totalorder %s102, %s103
      %p115 = scmp.eq.s32.totalorder %s25, 1
      %p116 = por %p114, %p115
      %p118 = scmp.ne.s32.totalorder %s103, %s117
      %p119 = scmp.eq.s32.totalorder %s25, 0
      %p120 = por %p118, %p119
      %s122 = sadd.s32 %s121, 1
      %p125 = scmp.eq.s32.totalorder %s19, 1
      %p126 = scmp.ne.s32.totalorder %s121, %s123
      %p127 = scmp.eq.s32.totalorder %s19, 0
      %p128 = por %p126, %p127
      %p129 = scmp.ne.s32.totalorder %s121, %s123
      %p130 = scmp.eq.s32.totalorder %s24, 1
      %p131 = por %p129, %p130
      %p132 = scmp.ne.s32.totalorder %s123, %s124
      %p133 = scmp.eq.s32.totalorder %s24, 0
      %p134 = por %p132, %p133
      %p135 = scmp.ne.s32.totalorder %s123, %s124
      %p136 = scmp.eq.s32.totalorder %s25, 1
      %p137 = por %p135, %p136
      %p139 = scmp.ne.s32.totalorder %s124, %s138
      %p140 = scmp.eq.s32.totalorder %s25, 0
      %p141 = por %p139, %p140
      %s142 = ssub.s32 %s19, %s26
      %p143 = scmp.eq.s32.totalorder %s142, 0
      %s145 = sadd.s32 %s144, 1
      %s146 = scalar_select %p143, %s144, %s145
      %p149 = pneg %p143
      %p150 = scmp.eq.s32.totalorder %s19, 1
      %p151 = por %p149, %p150
      %p152 = scmp.ne.s32.totalorder %s144, %s147
      %p153 = scmp.eq.s32.totalorder %s19, 0
      %p154 = por %p152, %p153
      %p155 = scmp.ne.s32.totalorder %s144, %s147
      %p156 = scmp.eq.s32.totalorder %s24, 1
      %p157 = por %p155, %p156
      %p158 = scmp.ne.s32.totalorder %s147, %s148
      %p159 = scmp.eq.s32.totalorder %s24, 0
      %p160 = por %p158, %p159
      %p161 = scmp.ne.s32.totalorder %s147, %s148
      %p162 = scmp.eq.s32.totalorder %s25, 1
      %p163 = por %p161, %p162
      %p165 = scmp.ne.s32.totalorder %s148, %s164
      %p166 = scmp.eq.s32.totalorder %s25, 0
      %p167 = por %p165, %p166
      %s168 = ssub.s32 %s19, %s26
      %p169 = scmp.eq.s32.totalorder %s168, 0
      %s171 = sadd.s32 %s170, 1
      %s172 = scalar_select %p169, %s170, %s171
      %p175 = pneg %p169
      %p176 = scmp.eq.s32.totalorder %s19, 1
      %p177 = por %p175, %p176
      %p178 = scmp.ne.s32.totalorder %s170, %s173
      %p179 = scmp.eq.s32.totalorder %s19, 0
      %p180 = por %p178, %p179
      %p181 = scmp.ne.s32.totalorder %s170, %s173
      %p182 = scmp.eq.s32.totalorder %s24, 1
      %p183 = por %p181, %p182
      %p184 = scmp.ne.s32.totalorder %s173, %s174
      %p185 = scmp.eq.s32.totalorder %s24, 0
      %p186 = por %p184, %p185
      %p187 = scmp.ne.s32.totalorder %s173, %s174
      %p188 = scmp.eq.s32.totalorder %s25, 1
      %p189 = por %p187, %p188
      %p191 = scmp.ne.s32.totalorder %s174, %s190
      %p192 = scmp.eq.s32.totalorder %s25, 0
      %p193 = por %p191, %p192
      %p194 = scmp.le.s32.totalorder 1, %s19
      %p195 = scmp.lt.s32.totalorder %s19, 3
      %p196 = pnand %p194, %p195
      %p197 = pneg %p196
      // Predicated region
      $region9: #{tpu_custom_call.1} parent=5 // pred_check
        _
      $region10: #{tpu_custom_call.1} parent=5 // pred_check_branch
        %199 = sbr.rel (%p196) target = $region12
      $region11: #{tpu_custom_call.1} parent=5 // pred_region
        %s200 = ssub.s32 %s19, 1
        // Predicated region
        $region13: #{tpu_custom_call.1} parent=11 // pred_check
          %p201 = pneg %p92
        $region14: #{tpu_custom_call.1} parent=11 // pred_check_branch
          %203 = sbr.rel (%p201) target = $region16
        $region15: #{tpu_custom_call.1} parent=11 // pred_region
          _
        $region16: #{tpu_custom_call.1} parent=11 // pred_fallthru
          _
        // Predicated region
        $region17: #{tpu_custom_call.1} parent=11 // pred_check
          %p204 = pneg %p113
        $region18: #{tpu_custom_call.1} parent=11 // pred_check_branch
          %206 = sbr.rel (%p204) target = $region20
        $region19: #{tpu_custom_call.1} parent=11 // pred_region
          _
        $region20: #{tpu_custom_call.1} parent=11 // pred_fallthru
          _
        // Predicated region
        $region21: #{tpu_custom_call.1} parent=11 // pred_check
          %p207 = pneg %p134
        $region22: #{tpu_custom_call.1} parent=11 // pred_check_branch
          %209 = sbr.rel (%p207) target = $region24
        $region23: #{tpu_custom_call.1} parent=11 // pred_region
          _
        $region24: #{tpu_custom_call.1} parent=11 // pred_fallthru
          _
      $region12: #{tpu_custom_call.1} parent=5 // pred_fallthru
        _
      %p210 = scmp.lt.s32.totalorder %s19, 2
      // Predicated region
      $region25: #{tpu_custom_call.1} parent=5 // pred_check
        %p211 = pneg %p210
      $region26: #{tpu_custom_call.1} parent=5 // pred_check_branch
        %213 = sbr.rel (%p211) target = $region28
      $region27: #{tpu_custom_call.1} parent=5 // pred_region
        // Predicated region
        $region29: #{tpu_custom_call.1} parent=27 // pred_check
          %p214 = pneg %p39
        $region30: #{tpu_custom_call.1} parent=27 // pred_check_branch
          %216 = sbr.rel (%p214) target = $region32
        $region31: #{tpu_custom_call.1} parent=27 // pred_region
          %p217 = scmp.lt.s32.totalorder %s19, 1
          %s218 = scalar_select %p217, %s19, 1
          %s219 = smul.addr %s218, 8
          %s220 = scalar_lea.vmem %s0, %s219
        $region32: #{tpu_custom_call.1} parent=27 // pred_fallthru
          _
        // Predicated region
        $region33: #{tpu_custom_call.1} parent=27 // pred_check
          %p221 = pneg %p65
        $region34: #{tpu_custom_call.1} parent=27 // pred_check_branch
          %223 = sbr.rel (%p221) target = $region36
        $region35: #{tpu_custom_call.1} parent=27 // pred_region
          %p224 = scmp.lt.s32.totalorder %s19, 1
          %s225 = scalar_select %p224, %s19, 1
          %s226 = scalar_lea.vmem %s1, %s225
        $region36: #{tpu_custom_call.1} parent=27 // pred_fallthru
          _
      $region28: #{tpu_custom_call.1} parent=5 // pred_fallthru
        _
      %p227 = scmp.le.s32.totalorder 1, %s19
      %p228 = scmp.lt.s32.totalorder %s19, 3
      %p229 = pnand %p227, %p228
      %p230 = pneg %p229
      // Predicated region
      $region37: #{tpu_custom_call.1} parent=5 // pred_check
        _
      $region38: #{tpu_custom_call.1} parent=5 // pred_check_branch
        %232 = sbr.rel (%p229) target = $region40
      $region39: #{tpu_custom_call.1} parent=5 // pred_region
        %s233 = ssub.s32 %s19, 1
        %p234 = scmp.lt.s32.totalorder %s24, 1
        %s235 = scalar_select %p234, %s24, 1
        %s236 = smul.addr %s235, 8
        %s237 = scalar_lea.vmem %s0, %s236
        %p238 = pneg %p45
        %p239 = pneg %p42
        %p240 = scmp.lt.s32.totalorder %s24, 1
        %s241 = scalar_select %p240, %s24, 1
        %s242 = scalar_lea.vmem %s1, %s241
        %p243 = pneg %p71
        %p244 = pneg %p68
        %p245 = pneg %p92
        %p246 = pneg %p89
        %p247 = pneg %p113
        %p248 = pneg %p110
        %p249 = pneg %p134
        %p250 = pneg %p131
        %p251 = pneg %p160
        %p252 = pneg %p157
        %s253 = sand.u32 %s147, 1
        %s254 = scalar_lea.sflag [#allocation3], %s253
        %s255 = sand.u32 %s147, 1
        %s256 = smul.addr %s255, 8
        %s257 = scalar_lea.vmem [#allocation2], %s256
        %p258 = pneg %p186
        %p259 = pneg %p183
        %s260 = sand.u32 %s173, 1
        %s261 = scalar_lea.sflag [#allocation5], %s260
        %s262 = sand.u32 %s173, 1
        %s263 = smul.addr %s262, 32
        %s264 = scalar_lea.vmem [#allocation4], %s263
        %p265 = scmp.lt.s32.totalorder %s24, 1
        %s266 = scalar_select %p265, %s24, 1
        %s267 = smul.addr %s266, 8
        %s268 = scalar_lea.vmem %s0, %s267
        %p269 = scmp.lt.s32.totalorder %s24, 1
        %s270 = scalar_select %p269, %s24, 1
        %s271 = scalar_lea.vmem %s1, %s270
        %v272 = vld [vmem:[%s268] sm:$0xff]
        %v273 = vld [vmem:[%s271] sm:$0x1]
        %v274 = vld [vmem:[%s2] sm:$0xff]
        %v275 = vld [vmem:[%s2 + $0x8] sm:$0xff]
        %v276 = vld [vmem:[%s2 + $0x10] sm:$0xff]
        %v277 = vld [vmem:[%s2 + $0x18] sm:$0xff]
        %v278 = vld [vmem:[%s2 + $0x28] sm:$0xff]
        %v279 = vld [vmem:[%s2 + $0x30] sm:$0xff]
        %v280 = vld [vmem:[%s2 + $0x38] sm:$0xff]
        %v281 = vld [vmem:[%s2 + $0x40] sm:$0xff]
        %v282 = vld [vmem:[%s2 + $0x50] sm:$0xff]
        %v283 = vld [vmem:[%s2 + $0x58] sm:$0xff]
        %v284 = vld [vmem:[%s2 + $0x60] sm:$0xff]
        %v285 = vld [vmem:[%s2 + $0x68] sm:$0xff]
        %v286 = vld [vmem:[%s2 + $0x78] sm:$0xff]
        %v287 = vld [vmem:[%s2 + $0x80] sm:$0xff]
        %v288 = vld [vmem:[%s2 + $0x88] sm:$0xff]
        %v289 = vld [vmem:[%s2 + $0x90] sm:$0xff]
        %v290 = vld [vmem:[%s2 + $0x20] sm:$0x1]
        %v291 = vld [vmem:[%s2 + $0x48] sm:$0x1]
        %v292 = vld [vmem:[%s2 + $0x70] sm:$0x1]
        %v293 = vld [vmem:[%s2 + $0x98] sm:$0x1]
        %v294 = vld [vmem:[%s3] sm:$0xff]
        %v295 = vld [vmem:[%s3 + $0x10] sm:$0xff]
        %v296 = vld [vmem:[%s3 + $0x20] sm:$0xff]
        %v297 = vld [vmem:[%s3 + $0x30] sm:$0xff]
        %v298 = vld [vmem:[%s3 + $0x8] sm:$0xff]
        %v299 = vld [vmem:[%s3 + $0x18] sm:$0xff]
        %v300 = vld [vmem:[%s3 + $0x28] sm:$0xff]
        %v301 = vld [vmem:[%s3 + $0x38] sm:$0xff]
        %v302 = vld [vmem:[%s4] sm:$0x1]
        %v303 = vld [vmem:[%s4 + $0x1] sm:$0x1]
        %v304 = vld [vmem:[%s4 + $0x2] sm:$0x1]
        %v305 = vlaneseq
        %v306 = vshrl.u32 %v305, 7
        %v307 = vsub.s32 0, %v306
        %v308 = vrot.slane %v290, %v307
        %v309 = vlaneseq
        %v310 = vshrl.u32 %v309, 7
        %v311 = vsub.s32 0, %v310
        %v312 = vrot.slane %v291, %v311
        %v313 = vlaneseq
        %v314 = vshrl.u32 %v313, 7
        %v315 = vsub.s32 0, %v314
        %v316 = vrot.slane %v292, %v315
        %v317 = vlaneseq
        %v318 = vshrl.u32 %v317, 7
        %v319 = vsub.s32 0, %v318
        %v320 = vrot.slane %v293, %v319
        %vm321 = vcmask 261120
        %v323 = vsel %vm321, %v272, 0
        %325 = vmatprep.subr.mxu0 0.0
        %326 = vmatpush1.msra.mxu0 %v274
        %327 = vmatprep.subr.mxu0 0.0
        %328 = vmatpush1.msra.mxu0 %v275
        %329 = vmatprep.subr.mxu0 0.0
        %330 = vmatpush1.msra.mxu0 %v276
        %331 = vmatprep.subr.mxu0 0.0
        %332 = vmatpush1.msra.mxu0 %v277
        %333 = vmatprep.subr.mxu0 0.0
        %334 = vmatpush1.msra.mxu0 0.0
        %335 = vmatprep.subr.mxu0 0.0
        %336 = vmatpush1.msra.mxu0 0.0
        %337 = vmatprep.subr.mxu0 0.0
        %338 = vmatpush1.msra.mxu0 0.0
        %339 = vmatprep.subr.mxu0 0.0
        %340 = vmatpush1.msra.mxu0 0.0
        %341 = vmatprep.subr.mxu0 0.0
        %342 = vmatpush1.msra.mxu0 0.0
        %343 = vmatprep.subr.mxu0 0.0
        %344 = vmatpush1.msra.mxu0 0.0
        %345 = vmatprep.subr.mxu0 0.0
        %346 = vmatpush1.msra.mxu0 0.0
        %347 = vmatprep.subr.mxu0 0.0
        %348 = vmatpush1.msra.mxu0 0.0
        %349 = vmatprep.subr.mxu0 0.0
        %350 = vmatpush1.msra.mxu0 0.0
        %351 = vmatprep.subr.mxu0 0.0
        %352 = vmatpush1.msra.mxu0 0.0
        %353 = vmatprep.subr.mxu0 0.0
        %354 = vmatpush1.msra.mxu0 0.0
        %355 = vmatprep.subr.mxu0 0.0
        %356 = vmatpush1.msra.mxu0 0.0
        %357 = vmatprep.subr.mxu0 0.0
        %358 = vmatpush1.msra.mxu0 0.0
        %359 = vmatprep.subr.mxu0 0.0
        %360 = vmatpush1.msra.mxu0 0.0
        %361 = vmatprep.subr.mxu0 0.0
        %362 = vmatpush1.msra.mxu0 0.0
        %363 = vmatprep.subr.mxu0 0.0
        %364 = vmatpush1.msra.mxu0 0.0
        %365 = vmatprep.subr.mxu0 0.0
        %366 = vmatpush1.msra.mxu0 0.0
        %367 = vmatprep.subr.mxu0 0.0
        %368 = vmatpush1.msra.mxu0 0.0
        %369 = vmatprep.subr.mxu0 0.0
        %370 = vmatpush1.msra.mxu0 0.0
        %371 = vmatprep.subr.mxu0 0.0
        %372 = vmatpush1.msra.mxu0 0.0
        %373 = vmatprep.subr.mxu0 0.0
        %374 = vmatpush1.msra.mxu0 0.0
        %375 = vmatprep.subr.mxu0 0.0
        %376 = vmatpush1.msra.mxu0 0.0
        %377 = vmatprep.subr.mxu0 0.0
        %378 = vmatpush1.msra.mxu0 0.0
        %379 = vmatprep.subr.mxu0 0.0
        %380 = vmatpush1.msra.mxu0 0.0
        %381 = vmatprep.subr.mxu0 0.0
        %382 = vmatpush1.msra.mxu0 0.0
        %383 = vmatprep.subr.mxu0 0.0
        %384 = vmatpush1.msra.mxu0 0.0
        %385 = vmatprep.subr.mxu0 0.0
        %386 = vmatpush1.msra.mxu0 0.0
        %387 = vmatprep.subr.mxu0 0.0
        %388 = vmatpush1.msra.mxu0 0.0
        %389 = vmatprep.mubr.f32.mxu0 0.0
        %390 = vmatmul.mubr.f32.gmra.mrb[0].mxu0 %v323
        %v391 = vpop.f32.mrb[0].mxu0
        %v392 = vadd.f32 %v308, %v391
        %v393 = vpop.f32.mrb[0].mxu0
        %394 = vdwg.mxu0
        %395 = vmatprep.subr.mxu0 0.0
        %396 = vmatpush1.msra.mxu0 %v278
        %397 = vmatprep.subr.mxu0 0.0
        %398 = vmatpush1.msra.mxu0 %v279
        %399 = vmatprep.subr.mxu0 0.0
        %400 = vmatpush1.msra.mxu0 %v280
        %401 = vmatprep.subr.mxu0 0.0
        %402 = vmatpush1.msra.mxu0 %v281
        %403 = vmatprep.subr.mxu0 0.0
        %404 = vmatpush1.msra.mxu0 0.0
        %405 = vmatprep.subr.mxu0 0.0
        %406 = vmatpush1.msra.mxu0 0.0
        %407 = vmatprep.subr.mxu0 0.0
        %408 = vmatpush1.msra.mxu0 0.0
        %409 = vmatprep.subr.mxu0 0.0
        %410 = vmatpush1.msra.mxu0 0.0
        %411 = vmatprep.subr.mxu0 0.0
        %412 = vmatpush1.msra.mxu0 0.0
        %413 = vmatprep.subr.mxu0 0.0
        %414 = vmatpush1.msra.mxu0 0.0
        %415 = vmatprep.subr.mxu0 0.0
        %416 = vmatpush1.msra.mxu0 0.0
        %417 = vmatprep.subr.mxu0 0.0
        %418 = vmatpush1.msra.mxu0 0.0
        %419 = vmatprep.subr.mxu0 0.0
        %420 = vmatpush1.msra.mxu0 0.0
        %421 = vmatprep.subr.mxu0 0.0
        %422 = vmatpush1.msra.mxu0 0.0
        %423 = vmatprep.subr.mxu0 0.0
        %424 = vmatpush1.msra.mxu0 0.0
        %425 = vmatprep.subr.mxu0 0.0
        %426 = vmatpush1.msra.mxu0 0.0
        %427 = vmatprep.subr.mxu0 0.0
        %428 = vmatpush1.msra.mxu0 0.0
        %429 = vmatprep.subr.mxu0 0.0
        %430 = vmatpush1.msra.mxu0 0.0
        %431 = vmatprep.subr.mxu0 0.0
        %432 = vmatpush1.msra.mxu0 0.0
        %433 = vmatprep.subr.mxu0 0.0
        %434 = vmatpush1.msra.mxu0 0.0
        %435 = vmatprep.subr.mxu0 0.0
        %436 = vmatpush1.msra.mxu0 0.0
        %437 = vmatprep.subr.mxu0 0.0
        %438 = vmatpush1.msra.mxu0 0.0
        %439 = vmatprep.subr.mxu0 0.0
        %440 = vmatpush1.msra.mxu0 0.0
        %441 = vmatprep.subr.mxu0 0.0
        %442 = vmatpush1.msra.mxu0 0.0
        %443 = vmatprep.subr.mxu0 0.0
        %444 = vmatpush1.msra.mxu0 0.0
        %445 = vmatprep.subr.mxu0 0.0
        %446 = vmatpush1.msra.mxu0 0.0
        %447 = vmatprep.subr.mxu0 0.0
        %448 = vmatpush1.msra.mxu0 0.0
        %449 = vmatprep.subr.mxu0 0.0
        %450 = vmatpush1.msra.mxu0 0.0
        %451 = vmatprep.subr.mxu0 0.0
        %452 = vmatpush1.msra.mxu0 0.0
        %453 = vmatprep.subr.mxu0 0.0
        %454 = vmatpush1.msra.mxu0 0.0
        %455 = vmatprep.subr.mxu0 0.0
        %456 = vmatpush1.msra.mxu0 0.0
        %457 = vmatprep.subr.mxu0 0.0
        %458 = vmatpush1.msra.mxu0 0.0
        %459 = vmatprep.mubr.f32.mxu0 0.0
        %460 = vmatmul.mubr.f32.gmra.mrb[0].mxu0 %v323
        %v461 = vpop.f32.mrb[0].mxu0
        %v462 = vadd.f32 %v312, %v461
        %v463 = vpop.f32.mrb[0].mxu0
        %464 = vdwg.mxu0
        %465 = vmatprep.subr.mxu0 0.0
        %466 = vmatpush1.msra.mxu0 %v282
        %467 = vmatprep.subr.mxu0 0.0
        %468 = vmatpush1.msra.mxu0 %v283
        %469 = vmatprep.subr.mxu0 0.0
        %470 = vmatpush1.msra.mxu0 %v284
        %471 = vmatprep.subr.mxu0 0.0
        %472 = vmatpush1.msra.mxu0 %v285
        %473 = vmatprep.subr.mxu0 0.0
        %474 = vmatpush1.msra.mxu0 0.0
        %475 = vmatprep.subr.mxu0 0.0
        %476 = vmatpush1.msra.mxu0 0.0
        %477 = vmatprep.subr.mxu0 0.0
        %478 = vmatpush1.msra.mxu0 0.0
        %479 = vmatprep.subr.mxu0 0.0
        %480 = vmatpush1.msra.mxu0 0.0
        %481 = vmatprep.subr.mxu0 0.0
        %482 = vmatpush1.msra.mxu0 0.0
        %483 = vmatprep.subr.mxu0 0.0
        %484 = vmatpush1.msra.mxu0 0.0
        %485 = vmatprep.subr.mxu0 0.0
        %486 = vmatpush1.msra.mxu0 0.0
        %487 = vmatprep.subr.mxu0 0.0
        %488 = vmatpush1.msra.mxu0 0.0
        %489 = vmatprep.subr.mxu0 0.0
        %490 = vmatpush1.msra.mxu0 0.0
        %491 = vmatprep.subr.mxu0 0.0
        %492 = vmatpush1.msra.mxu0 0.0
        %493 = vmatprep.subr.mxu0 0.0
        %494 = vmatpush1.msra.mxu0 0.0
        %495 = vmatprep.subr.mxu0 0.0
        %496 = vmatpush1.msra.mxu0 0.0
        %497 = vmatprep.subr.mxu0 0.0
        %498 = vmatpush1.msra.mxu0 0.0
        %499 = vmatprep.subr.mxu0 0.0
        %500 = vmatpush1.msra.mxu0 0.0
        %501 = vmatprep.subr.mxu0 0.0
        %502 = vmatpush1.msra.mxu0 0.0
        %503 = vmatprep.subr.mxu0 0.0
        %504 = vmatpush1.msra.mxu0 0.0
        %505 = vmatprep.subr.mxu0 0.0
        %506 = vmatpush1.msra.mxu0 0.0
        %507 = vmatprep.subr.mxu0 0.0
        %508 = vmatpush1.msra.mxu0 0.0
        %509 = vmatprep.subr.mxu0 0.0
        %510 = vmatpush1.msra.mxu0 0.0
        %511 = vmatprep.subr.mxu0 0.0
        %512 = vmatpush1.msra.mxu0 0.0
        %513 = vmatprep.subr.mxu0 0.0
        %514 = vmatpush1.msra.mxu0 0.0
        %515 = vmatprep.subr.mxu0 0.0
        %516 = vmatpush1.msra.mxu0 0.0
        %517 = vmatprep.subr.mxu0 0.0
        %518 = vmatpush1.msra.mxu0 0.0
        %519 = vmatprep.subr.mxu0 0.0
        %520 = vmatpush1.msra.mxu0 0.0
        %521 = vmatprep.subr.mxu0 0.0
        %522 = vmatpush1.msra.mxu0 0.0
        %523 = vmatprep.subr.mxu0 0.0
        %524 = vmatpush1.msra.mxu0 0.0
        %525 = vmatprep.subr.mxu0 0.0
        %526 = vmatpush1.msra.mxu0 0.0
        %527 = vmatprep.subr.mxu0 0.0
        %528 = vmatpush1.msra.mxu0 0.0
        %529 = vmatprep.mubr.f32.mxu0 0.0
        %530 = vmatmul.mubr.f32.gmra.mrb[0].mxu0 %v323
        %v531 = vpop.f32.mrb[0].mxu0
        %v532 = vadd.f32 %v316, %v531
        %v533 = vpop.f32.mrb[0].mxu0
        %534 = vdwg.mxu0
        %535 = vmatprep.subr.mxu0 0.0
        %536 = vmatpush1.msra.mxu0 %v286
        %537 = vmatprep.subr.mxu0 0.0
        %538 = vmatpush1.msra.mxu0 %v287
        %539 = vmatprep.subr.mxu0 0.0
        %540 = vmatpush1.msra.mxu0 %v288
        %541 = vmatprep.subr.mxu0 0.0
        %542 = vmatpush1.msra.mxu0 %v289
        %543 = vmatprep.subr.mxu0 0.0
        %544 = vmatpush1.msra.mxu0 0.0
        %545 = vmatprep.subr.mxu0 0.0
        %546 = vmatpush1.msra.mxu0 0.0
        %547 = vmatprep.subr.mxu0 0.0
        %548 = vmatpush1.msra.mxu0 0.0
        %549 = vmatprep.subr.mxu0 0.0
        %550 = vmatpush1.msra.mxu0 0.0
        %551 = vmatprep.subr.mxu0 0.0
        %552 = vmatpush1.msra.mxu0 0.0
        %553 = vmatprep.subr.mxu0 0.0
        %554 = vmatpush1.msra.mxu0 0.0
        %555 = vmatprep.subr.mxu0 0.0
        %556 = vmatpush1.msra.mxu0 0.0
        %557 = vmatprep.subr.mxu0 0.0
        %558 = vmatpush1.msra.mxu0 0.0
        %559 = vmatprep.subr.mxu0 0.0
        %560 = vmatpush1.msra.mxu0 0.0
        %561 = vmatprep.subr.mxu0 0.0
        %562 = vmatpush1.msra.mxu0 0.0
        %563 = vmatprep.subr.mxu0 0.0
        %564 = vmatpush1.msra.mxu0 0.0
        %565 = vmatprep.subr.mxu0 0.0
        %566 = vmatpush1.msra.mxu0 0.0
        %567 = vmatprep.subr.mxu0 0.0
        %568 = vmatpush1.msra.mxu0 0.0
        %569 = vmatprep.subr.mxu0 0.0
        %570 = vmatpush1.msra.mxu0 0.0
        %571 = vmatprep.subr.mxu0 0.0
        %572 = vmatpush1.msra.mxu0 0.0
        %573 = vmatprep.subr.mxu0 0.0
        %574 = vmatpush1.msra.mxu0 0.0
        %575 = vmatprep.subr.mxu0 0.0
        %576 = vmatpush1.msra.mxu0 0.0
        %577 = vmatprep.subr.mxu0 0.0
        %578 = vmatpush1.msra.mxu0 0.0
        %579 = vmatprep.subr.mxu0 0.0
        %580 = vmatpush1.msra.mxu0 0.0
        %581 = vmatprep.subr.mxu0 0.0
        %582 = vmatpush1.msra.mxu0 0.0
        %583 = vmatprep.subr.mxu0 0.0
        %584 = vmatpush1.msra.mxu0 0.0
        %585 = vmatprep.subr.mxu0 0.0
        %586 = vmatpush1.msra.mxu0 0.0
        %587 = vmatprep.subr.mxu0 0.0
        %588 = vmatpush1.msra.mxu0 0.0
        %589 = vmatprep.subr.mxu0 0.0
        %590 = vmatpush1.msra.mxu0 0.0
        %591 = vmatprep.subr.mxu0 0.0
        %592 = vmatpush1.msra.mxu0 0.0
        %593 = vmatprep.subr.mxu0 0.0
        %594 = vmatpush1.msra.mxu0 0.0
        %595 = vmatprep.subr.mxu0 0.0
        %596 = vmatpush1.msra.mxu0 0.0
        %597 = vmatprep.subr.mxu0 0.0
        %598 = vmatpush1.msra.mxu0 0.0
        %599 = vmatprep.mubr.f32.mxu0 0.0
        %600 = vmatmul.mubr.f32.gmra.mrb[0].mxu0 %v323
        %v601 = vpop.f32.mrb[0].mxu0
        %v602 = vadd.f32 %v320, %v601
        %v603 = vpop.f32.mrb[0].mxu0
        %604 = vdwg.mxu0
        %606 = vrot.lane.b32.xlu0 %v392, 120
        %v607 = vpop.permute.xlu0 %606
        %vm608 = vcmask 64512
        %v609 = vsel %vm608, %v392, 0
        %v611 = vsel %vm608, %v607, 0
        %613 = vmatprep.subr.mxu0 0.0
        %614 = vmatpush1.xpose.msra.mxu0 %v611
        %615 = vmatprep.subr.mxu0 0.0
        %616 = vmatpush1.xpose.msra.mxu0 0.0
        %617 = vmatprep.subr.mxu0 0.0
        %618 = vmatpush1.xpose.msra.mxu0 0.0
        %619 = vmatprep.subr.mxu0 0.0
        %620 = vmatpush1.xpose.msra.mxu0 0.0
        %621 = vmatprep.subr.mxu0 0.0
        %622 = vmatpush1.xpose.msra.mxu0 0.0
        %623 = vmatprep.subr.mxu0 0.0
        %624 = vmatpush1.xpose.msra.mxu0 0.0
        %625 = vmatprep.subr.mxu0 0.0
        %626 = vmatpush1.xpose.msra.mxu0 0.0
        %627 = vmatprep.subr.mxu0 0.0
        %628 = vmatpush1.xpose.msra.mxu0 0.0
        %629 = vmatprep.subr.mxu0 0.0
        %630 = vmatpush1.xpose.msra.mxu0 0.0
        %631 = vmatprep.subr.mxu0 0.0
        %632 = vmatpush1.xpose.msra.mxu0 0.0
        %633 = vmatprep.subr.mxu0 0.0
        %634 = vmatpush1.xpose.msra.mxu0 0.0
        %635 = vmatprep.subr.mxu0 0.0
        %636 = vmatpush1.xpose.msra.mxu0 0.0
        %637 = vmatprep.subr.mxu0 0.0
        %638 = vmatpush1.xpose.msra.mxu0 0.0
        %639 = vmatprep.subr.mxu0 0.0
        %640 = vmatpush1.xpose.msra.mxu0 0.0
        %641 = vmatprep.subr.mxu0 0.0
        %642 = vmatpush1.xpose.msra.mxu0 0.0
        %643 = vmatprep.subr.mxu0 0.0
        %644 = vmatpush1.xpose.msra.mxu0 0.0
        %645 = vmatprep.subr.mxu0 0.0
        %646 = vmatpush1.xpose.msra.mxu0 0.0
        %647 = vmatprep.subr.mxu0 0.0
        %648 = vmatpush1.xpose.msra.mxu0 0.0
        %649 = vmatprep.subr.mxu0 0.0
        %650 = vmatpush1.xpose.msra.mxu0 0.0
        %651 = vmatprep.subr.mxu0 0.0
        %652 = vmatpush1.xpose.msra.mxu0 0.0
        %653 = vmatprep.subr.mxu0 0.0
        %654 = vmatpush1.xpose.msra.mxu0 0.0
        %655 = vmatprep.subr.mxu0 0.0
        %656 = vmatpush1.xpose.msra.mxu0 0.0
        %657 = vmatprep.subr.mxu0 0.0
        %658 = vmatpush1.xpose.msra.mxu0 0.0
        %659 = vmatprep.subr.mxu0 0.0
        %660 = vmatpush1.xpose.msra.mxu0 0.0
        %661 = vmatprep.subr.mxu0 0.0
        %662 = vmatpush1.xpose.msra.mxu0 0.0
        %663 = vmatprep.subr.mxu0 0.0
        %664 = vmatpush1.xpose.msra.mxu0 0.0
        %665 = vmatprep.subr.mxu0 0.0
        %666 = vmatpush1.xpose.msra.mxu0 0.0
        %667 = vmatprep.subr.mxu0 0.0
        %668 = vmatpush1.xpose.msra.mxu0 0.0
        %669 = vmatprep.subr.mxu0 0.0
        %670 = vmatpush1.xpose.msra.mxu0 0.0
        %671 = vmatprep.subr.mxu0 0.0
        %672 = vmatpush1.xpose.msra.mxu0 0.0
        %673 = vmatprep.subr.mxu0 0.0
        %674 = vmatpush1.xpose.msra.mxu0 0.0
        %675 = vmatprep.subr.mxu0 0.0
        %676 = vmatpush1.xpose.msra.mxu0 0.0
        %677 = vmatprep.mubr.f32.mxu0 0.0
        %678 = vmatmul.mubr.f32.gmra.mrb[0].mxu0 %v609
        %v679 = vpop.f32.mrb[0].mxu0
        %v680 = vadd.f32 0.0, %v679
        %v681 = vpop.f32.mrb[0].mxu0
        %682 = vdwg.mxu0
        %684 = vrot.lane.b32.xlu0 %v462, 120
        %v685 = vpop.permute.xlu0 %684
        %v686 = vsel %vm608, %v462, 0
        %v688 = vsel %vm608, %v685, 0
        %690 = vmatprep.subr.mxu0 0.0
        %691 = vmatpush1.xpose.msra.mxu0 %v688
        %692 = vmatprep.subr.mxu0 0.0
        %693 = vmatpush1.xpose.msra.mxu0 0.0
        %694 = vmatprep.subr.mxu0 0.0
        %695 = vmatpush1.xpose.msra.mxu0 0.0
        %696 = vmatprep.subr.mxu0 0.0
        %697 = vmatpush1.xpose.msra.mxu0 0.0
        %698 = vmatprep.subr.mxu0 0.0
        %699 = vmatpush1.xpose.msra.mxu0 0.0
        %700 = vmatprep.subr.mxu0 0.0
        %701 = vmatpush1.xpose.msra.mxu0 0.0
        %702 = vmatprep.subr.mxu0 0.0
        %703 = vmatpush1.xpose.msra.mxu0 0.0
        %704 = vmatprep.subr.mxu0 0.0
        %705 = vmatpush1.xpose.msra.mxu0 0.0
        %706 = vmatprep.subr.mxu0 0.0
        %707 = vmatpush1.xpose.msra.mxu0 0.0
        %708 = vmatprep.subr.mxu0 0.0
        %709 = vmatpush1.xpose.msra.mxu0 0.0
        %710 = vmatprep.subr.mxu0 0.0
        %711 = vmatpush1.xpose.msra.mxu0 0.0
        %712 = vmatprep.subr.mxu0 0.0
        %713 = vmatpush1.xpose.msra.mxu0 0.0
        %714 = vmatprep.subr.mxu0 0.0
        %715 = vmatpush1.xpose.msra.mxu0 0.0
        %716 = vmatprep.subr.mxu0 0.0
        %717 = vmatpush1.xpose.msra.mxu0 0.0
        %718 = vmatprep.subr.mxu0 0.0
        %719 = vmatpush1.xpose.msra.mxu0 0.0
        %720 = vmatprep.subr.mxu0 0.0
        %721 = vmatpush1.xpose.msra.mxu0 0.0
        %722 = vmatprep.subr.mxu0 0.0
        %723 = vmatpush1.xpose.msra.mxu0 0.0
        %724 = vmatprep.subr.mxu0 0.0
        %725 = vmatpush1.xpose.msra.mxu0 0.0
        %726 = vmatprep.subr.mxu0 0.0
        %727 = vmatpush1.xpose.msra.mxu0 0.0
        %728 = vmatprep.subr.mxu0 0.0
        %729 = vmatpush1.xpose.msra.mxu0 0.0
        %730 = vmatprep.subr.mxu0 0.0
        %731 = vmatpush1.xpose.msra.mxu0 0.0
        %732 = vmatprep.subr.mxu0 0.0
        %733 = vmatpush1.xpose.msra.mxu0 0.0
        %734 = vmatprep.subr.mxu0 0.0
        %735 = vmatpush1.xpose.msra.mxu0 0.0
        %736 = vmatprep.subr.mxu0 0.0
        %737 = vmatpush1.xpose.msra.mxu0 0.0
        %738 = vmatprep.subr.mxu0 0.0
        %739 = vmatpush1.xpose.msra.mxu0 0.0
        %740 = vmatprep.subr.mxu0 0.0
        %741 = vmatpush1.xpose.msra.mxu0 0.0
        %742 = vmatprep.subr.mxu0 0.0
        %743 = vmatpush1.xpose.msra.mxu0 0.0
        %744 = vmatprep.subr.mxu0 0.0
        %745 = vmatpush1.xpose.msra.mxu0 0.0
        %746 = vmatprep.subr.mxu0 0.0
        %747 = vmatpush1.xpose.msra.mxu0 0.0
        %748 = vmatprep.subr.mxu0 0.0
        %749 = vmatpush1.xpose.msra.mxu0 0.0
        %750 = vmatprep.subr.mxu0 0.0
        %751 = vmatpush1.xpose.msra.mxu0 0.0
        %752 = vmatprep.subr.mxu0 0.0
        %753 = vmatpush1.xpose.msra.mxu0 0.0
        %754 = vmatprep.mubr.f32.mxu0 0.0
        %755 = vmatmul.mubr.f32.gmra.mrb[0].mxu0 %v686
        %v756 = vpop.f32.mrb[0].mxu0
        %v757 = vadd.f32 0.0, %v756
        %v758 = vpop.f32.mrb[0].mxu0
        %759 = vdwg.mxu0
        %761 = vrot.lane.b32.xlu0 %v532, 120
        %v762 = vpop.permute.xlu0 %761
        %v763 = vsel %vm608, %v532, 0
        %v765 = vsel %vm608, %v762, 0
        %767 = vmatprep.subr.mxu0 0.0
        %768 = vmatpush1.xpose.msra.mxu0 %v765
        %769 = vmatprep.subr.mxu0 0.0
        %770 = vmatpush1.xpose.msra.mxu0 0.0
        %771 = vmatprep.subr.mxu0 0.0
        %772 = vmatpush1.xpose.msra.mxu0 0.0
        %773 = vmatprep.subr.mxu0 0.0
        %774 = vmatpush1.xpose.msra.mxu0 0.0
        %775 = vmatprep.subr.mxu0 0.0
        %776 = vmatpush1.xpose.msra.mxu0 0.0
        %777 = vmatprep.subr.mxu0 0.0
        %778 = vmatpush1.xpose.msra.mxu0 0.0
        %779 = vmatprep.subr.mxu0 0.0
        %780 = vmatpush1.xpose.msra.mxu0 0.0
        %781 = vmatprep.subr.mxu0 0.0
        %782 = vmatpush1.xpose.msra.mxu0 0.0
        %783 = vmatprep.subr.mxu0 0.0
        %784 = vmatpush1.xpose.msra.mxu0 0.0
        %785 = vmatprep.subr.mxu0 0.0
        %786 = vmatpush1.xpose.msra.mxu0 0.0
        %787 = vmatprep.subr.mxu0 0.0
        %788 = vmatpush1.xpose.msra.mxu0 0.0
        %789 = vmatprep.subr.mxu0 0.0
        %790 = vmatpush1.xpose.msra.mxu0 0.0
        %791 = vmatprep.subr.mxu0 0.0
        %792 = vmatpush1.xpose.msra.mxu0 0.0
        %793 = vmatprep.subr.mxu0 0.0
        %794 = vmatpush1.xpose.msra.mxu0 0.0
        %795 = vmatprep.subr.mxu0 0.0
        %796 = vmatpush1.xpose.msra.mxu0 0.0
        %797 = vmatprep.subr.mxu0 0.0
        %798 = vmatpush1.xpose.msra.mxu0 0.0
        %799 = vmatprep.subr.mxu0 0.0
        %800 = vmatpush1.xpose.msra.mxu0 0.0
        %801 = vmatprep.subr.mxu0 0.0
        %802 = vmatpush1.xpose.msra.mxu0 0.0
        %803 = vmatprep.subr.mxu0 0.0
        %804 = vmatpush1.xpose.msra.mxu0 0.0
        %805 = vmatprep.subr.mxu0 0.0
        %806 = vmatpush1.xpose.msra.mxu0 0.0
        %807 = vmatprep.subr.mxu0 0.0
        %808 = vmatpush1.xpose.msra.mxu0 0.0
        %809 = vmatprep.subr.mxu0 0.0
        %810 = vmatpush1.xpose.msra.mxu0 0.0
        %811 = vmatprep.subr.mxu0 0.0
        %812 = vmatpush1.xpose.msra.mxu0 0.0
        %813 = vmatprep.subr.mxu0 0.0
        %814 = vmatpush1.xpose.msra.mxu0 0.0
        %815 = vmatprep.subr.mxu0 0.0
        %816 = vmatpush1.xpose.msra.mxu0 0.0
        %817 = vmatprep.subr.mxu0 0.0
        %818 = vmatpush1.xpose.msra.mxu0 0.0
        %819 = vmatprep.subr.mxu0 0.0
        %820 = vmatpush1.xpose.msra.mxu0 0.0
        %821 = vmatprep.subr.mxu0 0.0
        %822 = vmatpush1.xpose.msra.mxu0 0.0
        %823 = vmatprep.subr.mxu0 0.0
        %824 = vmatpush1.xpose.msra.mxu0 0.0
        %825 = vmatprep.subr.mxu0 0.0
        %826 = vmatpush1.xpose.msra.mxu0 0.0
        %827 = vmatprep.subr.mxu0 0.0
        %828 = vmatpush1.xpose.msra.mxu0 0.0
        %829 = vmatprep.subr.mxu0 0.0
        %830 = vmatpush1.xpose.msra.mxu0 0.0
        %831 = vmatprep.mubr.f32.mxu0 0.0
        %832 = vmatmul.mubr.f32.gmra.mrb[0].mxu0 %v763
        %v833 = vpop.f32.mrb[0].mxu0
        %v834 = vadd.f32 0.0, %v833
        %v835 = vpop.f32.mrb[0].mxu0
        %836 = vdwg.mxu0
        %838 = vrot.lane.b32.xlu0 %v602, 120
        %v839 = vpop.permute.xlu0 %838
        %v840 = vsel %vm608, %v602, 0
        %v842 = vsel %vm608, %v839, 0
        %844 = vmatprep.subr.mxu0 0.0
        %845 = vmatpush1.xpose.msra.mxu0 %v842
        %846 = vmatprep.subr.mxu0 0.0
        %847 = vmatpush1.xpose.msra.mxu0 0.0
        %848 = vmatprep.subr.mxu0 0.0
        %849 = vmatpush1.xpose.msra.mxu0 0.0
        %850 = vmatprep.subr.mxu0 0.0
        %851 = vmatpush1.xpose.msra.mxu0 0.0
        %852 = vmatprep.subr.mxu0 0.0
        %853 = vmatpush1.xpose.msra.mxu0 0.0
        %854 = vmatprep.subr.mxu0 0.0
        %855 = vmatpush1.xpose.msra.mxu0 0.0
        %856 = vmatprep.subr.mxu0 0.0
        %857 = vmatpush1.xpose.msra.mxu0 0.0
        %858 = vmatprep.subr.mxu0 0.0
        %859 = vmatpush1.xpose.msra.mxu0 0.0
        %860 = vmatprep.subr.mxu0 0.0
        %861 = vmatpush1.xpose.msra.mxu0 0.0
        %862 = vmatprep.subr.mxu0 0.0
        %863 = vmatpush1.xpose.msra.mxu0 0.0
        %864 = vmatprep.subr.mxu0 0.0
        %865 = vmatpush1.xpose.msra.mxu0 0.0
        %866 = vmatprep.subr.mxu0 0.0
        %867 = vmatpush1.xpose.msra.mxu0 0.0
        %868 = vmatprep.subr.mxu0 0.0
        %869 = vmatpush1.xpose.msra.mxu0 0.0
        %870 = vmatprep.subr.mxu0 0.0
        %871 = vmatpush1.xpose.msra.mxu0 0.0
        %872 = vmatprep.subr.mxu0 0.0
        %873 = vmatpush1.xpose.msra.mxu0 0.0
        %874 = vmatprep.subr.mxu0 0.0
        %875 = vmatpush1.xpose.msra.mxu0 0.0
        %876 = vmatprep.subr.mxu0 0.0
        %877 = vmatpush1.xpose.msra.mxu0 0.0
        %878 = vmatprep.subr.mxu0 0.0
        %879 = vmatpush1.xpose.msra.mxu0 0.0
        %880 = vmatprep.subr.mxu0 0.0
        %881 = vmatpush1.xpose.msra.mxu0 0.0
        %882 = vmatprep.subr.mxu0 0.0
        %883 = vmatpush1.xpose.msra.mxu0 0.0
        %884 = vmatprep.subr.mxu0 0.0
        %885 = vmatpush1.xpose.msra.mxu0 0.0
        %886 = vmatprep.subr.mxu0 0.0
        %887 = vmatpush1.xpose.msra.mxu0 0.0
        %888 = vmatprep.subr.mxu0 0.0
        %889 = vmatpush1.xpose.msra.mxu0 0.0
        %890 = vmatprep.subr.mxu0 0.0
        %891 = vmatpush1.xpose.msra.mxu0 0.0
        %892 = vmatprep.subr.mxu0 0.0
        %893 = vmatpush1.xpose.msra.mxu0 0.0
        %894 = vmatprep.subr.mxu0 0.0
        %895 = vmatpush1.xpose.msra.mxu0 0.0
        %896 = vmatprep.subr.mxu0 0.0
        %897 = vmatpush1.xpose.msra.mxu0 0.0
        %898 = vmatprep.subr.mxu0 0.0
        %899 = vmatpush1.xpose.msra.mxu0 0.0
        %900 = vmatprep.subr.mxu0 0.0
        %901 = vmatpush1.xpose.msra.mxu0 0.0
        %902 = vmatprep.subr.mxu0 0.0
        %903 = vmatpush1.xpose.msra.mxu0 0.0
        %904 = vmatprep.subr.mxu0 0.0
        %905 = vmatpush1.xpose.msra.mxu0 0.0
        %906 = vmatprep.subr.mxu0 0.0
        %907 = vmatpush1.xpose.msra.mxu0 0.0
        %908 = vmatprep.mubr.f32.mxu0 0.0
        %909 = vmatmul.mubr.f32.gmra.mrb[0].mxu0 %v840
        %v910 = vpop.f32.mrb[0].mxu0
        %v911 = vadd.f32 0.0, %v910
        %v912 = vpop.f32.mrb[0].mxu0
        %913 = vdwg.mxu0
        %v914 = vsel %vm608, %v680, -inf
        %915 = vmax.xlane.f32.xlu0 %v914
        %v916 = vpop.xlane.xlu0 %915
        %v917 = vsel %vm608, %v757, -inf
        %918 = vmax.xlane.f32.xlu0 %v917
        %v919 = vpop.xlane.xlu0 %918
        %v920 = vsel %vm608, %v834, -inf
        %921 = vmax.xlane.f32.xlu0 %v920
        %v922 = vpop.xlane.xlu0 %921
        %v923 = vsel %vm608, %v911, -inf
        %924 = vmax.xlane.f32.xlu0 %v923
        %v925 = vpop.xlane.xlu0 %924
        %v926 = vsub.f32 %v680, %v916
        %v927 = vsub.f32 %v757, %v919
        %v928 = vsub.f32 %v834, %v922
        %v929 = vsub.f32 %v911, %v925
        %v930 = vmul.f32 %v926, 1.442695
        %v931 = vpow.pop %v930
        %v932 = vmul.f32 %v927, 1.442695
        %v933 = vpow.pop %v932
        %v934 = vmul.f32 %v928, 1.442695
        %v935 = vpow.pop %v934
        %v936 = vmul.f32 %v929, 1.442695
        %v937 = vpow.pop %v936
        %v938 = vsel %vm608, %v931, 0.0
        %939 = vadd.xlane.f32.xlu0 %v938
        %v940 = vpop.xlane.xlu0 %939
        %v941 = vsel %vm608, %v933, 0.0
        %942 = vadd.xlane.f32.xlu0 %v941
        %v943 = vpop.xlane.xlu0 %942
        %v944 = vsel %vm608, %v935, 0.0
        %945 = vadd.xlane.f32.xlu0 %v944
        %v946 = vpop.xlane.xlu0 %945
        %v947 = vsel %vm608, %v937, 0.0
        %948 = vadd.xlane.f32.xlu0 %v947
        %v949 = vpop.xlane.xlu0 %948
        %v950 = vrcp.pop %v940
        %v951 = vrcp.pop %v943
        %v952 = vrcp.pop %v946
        %v953 = vrcp.pop %v949
        %v954 = vmul.f32 %v931, %v950
        %v955 = vmul.f32 %v933, %v951
        %v956 = vmul.f32 %v935, %v952
        %v957 = vmul.f32 %v937, %v953
        %958 = vst.msk [vmem:[%s264] sm:$0xff] %vm608, %v954
        %959 = vst.msk [vmem:[%s264 + $0x8] sm:$0xff] %vm608, %v955
        %960 = vst.msk [vmem:[%s264 + $0x10] sm:$0xff] %vm608, %v956
        %961 = vst.msk [vmem:[%s264 + $0x18] sm:$0xff] %vm608, %v957
        %962 = vrot.lane.b32.xlu0 %v392, 112
        %v963 = vpop.permute.xlu0 %962
        %v966 = vsel %vm608, %v954, 0
        %968 = vmatprep.subr.mxu0 0.0
        %969 = vmatpush1.msra.mxu0 %v963
        %970 = vmatprep.subr.mxu0 0.0
        %971 = vmatpush1.msra.mxu0 0.0
        %972 = vmatprep.subr.mxu0 0.0
        %973 = vmatpush1.msra.mxu0 0.0
        %974 = vmatprep.subr.mxu0 0.0
        %975 = vmatpush1.msra.mxu0 0.0
        %976 = vmatprep.subr.mxu0 0.0
        %977 = vmatpush1.msra.mxu0 0.0
        %978 = vmatprep.subr.mxu0 0.0
        %979 = vmatpush1.msra.mxu0 0.0
        %980 = vmatprep.subr.mxu0 0.0
        %981 = vmatpush1.msra.mxu0 0.0
        %982 = vmatprep.subr.mxu0 0.0
        %983 = vmatpush1.msra.mxu0 0.0
        %984 = vmatprep.subr.mxu0 0.0
        %985 = vmatpush1.msra.mxu0 0.0
        %986 = vmatprep.subr.mxu0 0.0
        %987 = vmatpush1.msra.mxu0 0.0
        %988 = vmatprep.subr.mxu0 0.0
        %989 = vmatpush1.msra.mxu0 0.0
        %990 = vmatprep.subr.mxu0 0.0
        %991 = vmatpush1.msra.mxu0 0.0
        %992 = vmatprep.subr.mxu0 0.0
        %993 = vmatpush1.msra.mxu0 0.0
        %994 = vmatprep.subr.mxu0 0.0
        %995 = vmatpush1.msra.mxu0 0.0
        %996 = vmatprep.subr.mxu0 0.0
        %997 = vmatpush1.msra.mxu0 0.0
        %998 = vmatprep.subr.mxu0 0.0
        %999 = vmatpush1.msra.mxu0 0.0
        %1000 = vmatprep.subr.mxu0 0.0
        %1001 = vmatpush1.msra.mxu0 0.0
        %1002 = vmatprep.subr.mxu0 0.0
        %1003 = vmatpush1.msra.mxu0 0.0
        %1004 = vmatprep.subr.mxu0 0.0
        %1005 = vmatpush1.msra.mxu0 0.0
        %1006 = vmatprep.subr.mxu0 0.0
        %1007 = vmatpush1.msra.mxu0 0.0
        %1008 = vmatprep.subr.mxu0 0.0
        %1009 = vmatpush1.msra.mxu0 0.0
        %1010 = vmatprep.subr.mxu0 0.0
        %1011 = vmatpush1.msra.mxu0 0.0
        %1012 = vmatprep.subr.mxu0 0.0
        %1013 = vmatpush1.msra.mxu0 0.0
        %1014 = vmatprep.subr.mxu0 0.0
        %1015 = vmatpush1.msra.mxu0 0.0
        %1016 = vmatprep.subr.mxu0 0.0
        %1017 = vmatpush1.msra.mxu0 0.0
        %1018 = vmatprep.subr.mxu0 0.0
        %1019 = vmatpush1.msra.mxu0 0.0
        %1020 = vmatprep.subr.mxu0 0.0
        %1021 = vmatpush1.msra.mxu0 0.0
        %1022 = vmatprep.subr.mxu0 0.0
        %1023 = vmatpush1.msra.mxu0 0.0
        %1024 = vmatprep.subr.mxu0 0.0
        %1025 = vmatpush1.msra.mxu0 0.0
        %1026 = vmatprep.subr.mxu0 0.0
        %1027 = vmatpush1.msra.mxu0 0.0
        %1028 = vmatprep.subr.mxu0 0.0
        %1029 = vmatpush1.msra.mxu0 0.0
        %1030 = vmatprep.subr.mxu0 0.0
        %1031 = vmatpush1.msra.mxu0 0.0
        %1032 = vmatprep.mubr.f32.mxu0 0.0
        %1033 = vmatmul.mubr.f32.gmra.mrb[0].mxu0 %v966
        %v1034 = vpop.f32.mrb[0].mxu0
        %v1035 = vadd.f32 0.0, %v1034
        %v1036 = vpop.f32.mrb[0].mxu0
        %1037 = vdwg.mxu0
        %1038 = vrot.lane.b32.xlu0 %v462, 112
        %v1039 = vpop.permute.xlu0 %1038
        %v1042 = vsel %vm608, %v955, 0
        %1044 = vmatprep.subr.mxu0 0.0
        %1045 = vmatpush1.msra.mxu0 %v1039
        %1046 = vmatprep.subr.mxu0 0.0
        %1047 = vmatpush1.msra.mxu0 0.0
        %1048 = vmatprep.subr.mxu0 0.0
        %1049 = vmatpush1.msra.mxu0 0.0
        %1050 = vmatprep.subr.mxu0 0.0
        %1051 = vmatpush1.msra.mxu0 0.0
        %1052 = vmatprep.subr.mxu0 0.0
        %1053 = vmatpush1.msra.mxu0 0.0
        %1054 = vmatprep.subr.mxu0 0.0
        %1055 = vmatpush1.msra.mxu0 0.0
        %1056 = vmatprep.subr.mxu0 0.0
        %1057 = vmatpush1.msra.mxu0 0.0
        %1058 = vmatprep.subr.mxu0 0.0
        %1059 = vmatpush1.msra.mxu0 0.0
        %1060 = vmatprep.subr.mxu0 0.0
        %1061 = vmatpush1.msra.mxu0 0.0
        %1062 = vmatprep.subr.mxu0 0.0
        %1063 = vmatpush1.msra.mxu0 0.0
        %1064 = vmatprep.subr.mxu0 0.0
        %1065 = vmatpush1.msra.mxu0 0.0
        %1066 = vmatprep.subr.mxu0 0.0
        %1067 = vmatpush1.msra.mxu0 0.0
        %1068 = vmatprep.subr.mxu0 0.0
        %1069 = vmatpush1.msra.mxu0 0.0
        %1070 = vmatprep.subr.mxu0 0.0
        %1071 = vmatpush1.msra.mxu0 0.0
        %1072 = vmatprep.subr.mxu0 0.0
        %1073 = vmatpush1.msra.mxu0 0.0
        %1074 = vmatprep.subr.mxu0 0.0
        %1075 = vmatpush1.msra.mxu0 0.0
        %1076 = vmatprep.subr.mxu0 0.0
        %1077 = vmatpush1.msra.mxu0 0.0
        %1078 = vmatprep.subr.mxu0 0.0
        %1079 = vmatpush1.msra.mxu0 0.0
        %1080 = vmatprep.subr.mxu0 0.0
        %1081 = vmatpush1.msra.mxu0 0.0
        %1082 = vmatprep.subr.mxu0 0.0
        %1083 = vmatpush1.msra.mxu0 0.0
        %1084 = vmatprep.subr.mxu0 0.0
        %1085 = vmatpush1.msra.mxu0 0.0
        %1086 = vmatprep.subr.mxu0 0.0
        %1087 = vmatpush1.msra.mxu0 0.0
        %1088 = vmatprep.subr.mxu0 0.0
        %1089 = vmatpush1.msra.mxu0 0.0
        %1090 = vmatprep.subr.mxu0 0.0
        %1091 = vmatpush1.msra.mxu0 0.0
        %1092 = vmatprep.subr.mxu0 0.0
        %1093 = vmatpush1.msra.mxu0 0.0
        %1094 = vmatprep.subr.mxu0 0.0
        %1095 = vmatpush1.msra.mxu0 0.0
        %1096 = vmatprep.subr.mxu0 0.0
        %1097 = vmatpush1.msra.mxu0 0.0
        %1098 = vmatprep.subr.mxu0 0.0
        %1099 = vmatpush1.msra.mxu0 0.0
        %1100 = vmatprep.subr.mxu0 0.0
        %1101 = vmatpush1.msra.mxu0 0.0
        %1102 = vmatprep.subr.mxu0 0.0
        %1103 = vmatpush1.msra.mxu0 0.0
        %1104 = vmatprep.subr.mxu0 0.0
        %1105 = vmatpush1.msra.mxu0 0.0
        %1106 = vmatprep.subr.mxu0 0.0
        %1107 = vmatpush1.msra.mxu0 0.0
        %1108 = vmatprep.mubr.f32.mxu0 0.0
        %1109 = vmatmul.mubr.f32.gmra.mrb[0].mxu0 %v1042
        %v1110 = vpop.f32.mrb[0].mxu0
        %v1111 = vadd.f32 0.0, %v1110
        %v1112 = vpop.f32.mrb[0].mxu0
        %1113 = vdwg.mxu0
        %1114 = vrot.lane.b32.xlu0 %v532, 112
        %v1115 = vpop.permute.xlu0 %1114
        %v1118 = vsel %vm608, %v956, 0
        %1120 = vmatprep.subr.mxu0 0.0
        %1121 = vmatpush1.msra.mxu0 %v1115
        %1122 = vmatprep.subr.mxu0 0.0
        %1123 = vmatpush1.msra.mxu0 0.0
        %1124 = vmatprep.subr.mxu0 0.0
        %1125 = vmatpush1.msra.mxu0 0.0
        %1126 = vmatprep.subr.mxu0 0.0
        %1127 = vmatpush1.msra.mxu0 0.0
        %1128 = vmatprep.subr.mxu0 0.0
        %1129 = vmatpush1.msra.mxu0 0.0
        %1130 = vmatprep.subr.mxu0 0.0
        %1131 = vmatpush1.msra.mxu0 0.0
        %1132 = vmatprep.subr.mxu0 0.0
        %1133 = vmatpush1.msra.mxu0 0.0
        %1134 = vmatprep.subr.mxu0 0.0
        %1135 = vmatpush1.msra.mxu0 0.0
        %1136 = vmatprep.subr.mxu0 0.0
        %1137 = vmatpush1.msra.mxu0 0.0
        %1138 = vmatprep.subr.mxu0 0.0
        %1139 = vmatpush1.msra.mxu0 0.0
        %1140 = vmatprep.subr.mxu0 0.0
        %1141 = vmatpush1.msra.mxu0 0.0
        %1142 = vmatprep.subr.mxu0 0.0
        %1143 = vmatpush1.msra.mxu0 0.0
        %1144 = vmatprep.subr.mxu0 0.0
        %1145 = vmatpush1.msra.mxu0 0.0
        %1146 = vmatprep.subr.mxu0 0.0
        %1147 = vmatpush1.msra.mxu0 0.0
        %1148 = vmatprep.subr.mxu0 0.0
        %1149 = vmatpush1.msra.mxu0 0.0
        %1150 = vmatprep.subr.mxu0 0.0
        %1151 = vmatpush1.msra.mxu0 0.0
        %1152 = vmatprep.subr.mxu0 0.0
        %1153 = vmatpush1.msra.mxu0 0.0
        %1154 = vmatprep.subr.mxu0 0.0
        %1155 = vmatpush1.msra.mxu0 0.0
        %1156 = vmatprep.subr.mxu0 0.0
        %1157 = vmatpush1.msra.mxu0 0.0
        %1158 = vmatprep.subr.mxu0 0.0
        %1159 = vmatpush1.msra.mxu0 0.0
        %1160 = vmatprep.subr.mxu0 0.0
        %1161 = vmatpush1.msra.mxu0 0.0
        %1162 = vmatprep.subr.mxu0 0.0
        %1163 = vmatpush1.msra.mxu0 0.0
        %1164 = vmatprep.subr.mxu0 0.0
        %1165 = vmatpush1.msra.mxu0 0.0
        %1166 = vmatprep.subr.mxu0 0.0
        %1167 = vmatpush1.msra.mxu0 0.0
        %1168 = vmatprep.subr.mxu0 0.0
        %1169 = vmatpush1.msra.mxu0 0.0
        %1170 = vmatprep.subr.mxu0 0.0
        %1171 = vmatpush1.msra.mxu0 0.0
        %1172 = vmatprep.subr.mxu0 0.0
        %1173 = vmatpush1.msra.mxu0 0.0
        %1174 = vmatprep.subr.mxu0 0.0
        %1175 = vmatpush1.msra.mxu0 0.0
        %1176 = vmatprep.subr.mxu0 0.0
        %1177 = vmatpush1.msra.mxu0 0.0
        %1178 = vmatprep.subr.mxu0 0.0
        %1179 = vmatpush1.msra.mxu0 0.0
        %1180 = vmatprep.subr.mxu0 0.0
        %1181 = vmatpush1.msra.mxu0 0.0
        %1182 = vmatprep.subr.mxu0 0.0
        %1183 = vmatpush1.msra.mxu0 0.0
        %1184 = vmatprep.mubr.f32.mxu0 0.0
        %1185 = vmatmul.mubr.f32.gmra.mrb[0].mxu0 %v1118
        %v1186 = vpop.f32.mrb[0].mxu0
        %v1187 = vadd.f32 0.0, %v1186
        %v1188 = vpop.f32.mrb[0].mxu0
        %1189 = vdwg.mxu0
        %1190 = vrot.lane.b32.xlu0 %v602, 112
        %v1191 = vpop.permute.xlu0 %1190
        %v1194 = vsel %vm608, %v957, 0
        %1196 = vmatprep.subr.mxu0 0.0
        %1197 = vmatpush1.msra.mxu0 %v1191
        %1198 = vmatprep.subr.mxu0 0.0
        %1199 = vmatpush1.msra.mxu0 0.0
        %1200 = vmatprep.subr.mxu0 0.0
        %1201 = vmatpush1.msra.mxu0 0.0
        %1202 = vmatprep.subr.mxu0 0.0
        %1203 = vmatpush1.msra.mxu0 0.0
        %1204 = vmatprep.subr.mxu0 0.0
        %1205 = vmatpush1.msra.mxu0 0.0
        %1206 = vmatprep.subr.mxu0 0.0
        %1207 = vmatpush1.msra.mxu0 0.0
        %1208 = vmatprep.subr.mxu0 0.0
        %1209 = vmatpush1.msra.mxu0 0.0
        %1210 = vmatprep.subr.mxu0 0.0
        %1211 = vmatpush1.msra.mxu0 0.0
        %1212 = vmatprep.subr.mxu0 0.0
        %1213 = vmatpush1.msra.mxu0 0.0
        %1214 = vmatprep.subr.mxu0 0.0
        %1215 = vmatpush1.msra.mxu0 0.0
        %1216 = vmatprep.subr.mxu0 0.0
        %1217 = vmatpush1.msra.mxu0 0.0
        %1218 = vmatprep.subr.mxu0 0.0
        %1219 = vmatpush1.msra.mxu0 0.0
        %1220 = vmatprep.subr.mxu0 0.0
        %1221 = vmatpush1.msra.mxu0 0.0
        %1222 = vmatprep.subr.mxu0 0.0
        %1223 = vmatpush1.msra.mxu0 0.0
        %1224 = vmatprep.subr.mxu0 0.0
        %1225 = vmatpush1.msra.mxu0 0.0
        %1226 = vmatprep.subr.mxu0 0.0
        %1227 = vmatpush1.msra.mxu0 0.0
        %1228 = vmatprep.subr.mxu0 0.0
        %1229 = vmatpush1.msra.mxu0 0.0
        %1230 = vmatprep.subr.mxu0 0.0
        %1231 = vmatpush1.msra.mxu0 0.0
        %1232 = vmatprep.subr.mxu0 0.0
        %1233 = vmatpush1.msra.mxu0 0.0
        %1234 = vmatprep.subr.mxu0 0.0
        %1235 = vmatpush1.msra.mxu0 0.0
        %1236 = vmatprep.subr.mxu0 0.0
        %1237 = vmatpush1.msra.mxu0 0.0
        %1238 = vmatprep.subr.mxu0 0.0
        %1239 = vmatpush1.msra.mxu0 0.0
        %1240 = vmatprep.subr.mxu0 0.0
        %1241 = vmatpush1.msra.mxu0 0.0
        %1242 = vmatprep.subr.mxu0 0.0
        %1243 = vmatpush1.msra.mxu0 0.0
        %1244 = vmatprep.subr.mxu0 0.0
        %1245 = vmatpush1.msra.mxu0 0.0
        %1246 = vmatprep.subr.mxu0 0.0
        %1247 = vmatpush1.msra.mxu0 0.0
        %1248 = vmatprep.subr.mxu0 0.0
        %1249 = vmatpush1.msra.mxu0 0.0
        %1250 = vmatprep.subr.mxu0 0.0
        %1251 = vmatpush1.msra.mxu0 0.0
        %1252 = vmatprep.subr.mxu0 0.0
        %1253 = vmatpush1.msra.mxu0 0.0
        %1254 = vmatprep.subr.mxu0 0.0
        %1255 = vmatpush1.msra.mxu0 0.0
        %1256 = vmatprep.subr.mxu0 0.0
        %1257 = vmatpush1.msra.mxu0 0.0
        %1258 = vmatprep.subr.mxu0 0.0
        %1259 = vmatpush1.msra.mxu0 0.0
        %1260 = vmatprep.mubr.f32.mxu0 0.0
        %1261 = vmatmul.mubr.f32.gmra.mrb[0].mxu0 %v1194
        %v1262 = vpop.f32.mrb[0].mxu0
        %v1263 = vadd.f32 0.0, %v1262
        %v1264 = vpop.f32.mrb[0].mxu0
        %1265 = vdwg.mxu0
        %v1267 = vlaneseq
        %v1268 = vshrl.u32 %v1267, 7
        %v1269 = vsub.s32 0, %v1268
        %v1270 = vrot.slane %v303, %v1269
        %v1272 = vadd.f32 %v1270, %v1035
        %v1273 = vadd.f32 %v1272, %v1111
        %v1274 = vadd.f32 %v1273, %v1187
        %v1275 = vadd.f32 %v1274, %v1263
        %v1276 = vadd.f32 %v272, %v1275
        %v1277 = vsel %vm321, %v1276, 0.0
        %1278 = vadd.xlane.f32.xlu0 %v1277
        %v1279 = vpop.xlane.xlu0 %1278
        %v1280 = vrcp.pop 32.0
        %v1281 = vmul.f32 %v1279, %v1280
        %v1282 = vsub.f32 %v1276, %v1281
        %v1283 = vmul.f32 %v1282, %v1282
        %v1284 = vsel %vm321, %v1283, 0.0
        %1285 = vadd.xlane.f32.xlu0 %v1284
        %v1286 = vpop.xlane.xlu0 %1285
        %v1287 = vmul.f32 %v1286, %v1280
        %v1288 = vadd.f32 %v1287, 1e-05
        %v1289 = vrsqrt.pop %v1288
        %v1290 = vmul.f32 %v1282, %v1289
        %1291 = vrot.lane.b32.xlu0 %v1270, 96
        %v1292 = vpop.permute.xlu0 %1291
        %v1294 = vmul.f32 %v1290, %v1292
        %1295 = vrot.lane.b32.xlu0 %v1270, 64
        %v1296 = vpop.permute.xlu0 %1295
        %v1298 = vadd.f32 %v1294, %v1296
        %v1300 = vlaneseq
        %v1301 = vshrl.u32 %v1300, 7
        %v1302 = vsub.s32 0, %v1301
        %v1303 = vrot.slane %v302, %v1302
        %v1306 = vsel %vm321, %v1298, 0
        %1308 = vmatprep.subr.mxu0 0.0
        %1309 = vmatpush1.msra.mxu0 %v294
        %1310 = vmatprep.subr.mxu0 0.0
        %1311 = vmatpush1.msra.mxu0 %v295
        %1312 = vmatprep.subr.mxu0 0.0
        %1313 = vmatpush1.msra.mxu0 %v296
        %1314 = vmatprep.subr.mxu0 0.0
        %1315 = vmatpush1.msra.mxu0 %v297
        %1316 = vmatprep.subr.mxu0 0.0
        %1317 = vmatpush1.msra.mxu0 0.0
        %1318 = vmatprep.subr.mxu0 0.0
        %1319 = vmatpush1.msra.mxu0 0.0
        %1320 = vmatprep.subr.mxu0 0.0
        %1321 = vmatpush1.msra.mxu0 0.0
        %1322 = vmatprep.subr.mxu0 0.0
        %1323 = vmatpush1.msra.mxu0 0.0
        %1324 = vmatprep.subr.mxu0 0.0
        %1325 = vmatpush1.msra.mxu0 0.0
        %1326 = vmatprep.subr.mxu0 0.0
        %1327 = vmatpush1.msra.mxu0 0.0
        %1328 = vmatprep.subr.mxu0 0.0
        %1329 = vmatpush1.msra.mxu0 0.0
        %1330 = vmatprep.subr.mxu0 0.0
        %1331 = vmatpush1.msra.mxu0 0.0
        %1332 = vmatprep.subr.mxu0 0.0
        %1333 = vmatpush1.msra.mxu0 0.0
        %1334 = vmatprep.subr.mxu0 0.0
        %1335 = vmatpush1.msra.mxu0 0.0
        %1336 = vmatprep.subr.mxu0 0.0
        %1337 = vmatpush1.msra.mxu0 0.0
        %1338 = vmatprep.subr.mxu0 0.0
        %1339 = vmatpush1.msra.mxu0 0.0
        %1340 = vmatprep.subr.mxu0 0.0
        %1341 = vmatpush1.msra.mxu0 0.0
        %1342 = vmatprep.subr.mxu0 0.0
        %1343 = vmatpush1.msra.mxu0 0.0
        %1344 = vmatprep.subr.mxu0 0.0
        %1345 = vmatpush1.msra.mxu0 0.0
        %1346 = vmatprep.subr.mxu0 0.0
        %1347 = vmatpush1.msra.mxu0 0.0
        %1348 = vmatprep.subr.mxu0 0.0
        %1349 = vmatpush1.msra.mxu0 0.0
        %1350 = vmatprep.subr.mxu0 0.0
        %1351 = vmatpush1.msra.mxu0 0.0
        %1352 = vmatprep.subr.mxu0 0.0
        %1353 = vmatpush1.msra.mxu0 0.0
        %1354 = vmatprep.subr.mxu0 0.0
        %1355 = vmatpush1.msra.mxu0 0.0
        %1356 = vmatprep.subr.mxu0 0.0
        %1357 = vmatpush1.msra.mxu0 0.0
        %1358 = vmatprep.subr.mxu0 0.0
        %1359 = vmatpush1.msra.mxu0 0.0
        %1360 = vmatprep.subr.mxu0 0.0
        %1361 = vmatpush1.msra.mxu0 0.0
        %1362 = vmatprep.subr.mxu0 0.0
        %1363 = vmatpush1.msra.mxu0 0.0
        %1364 = vmatprep.subr.mxu0 0.0
        %1365 = vmatpush1.msra.mxu0 0.0
        %1366 = vmatprep.subr.mxu0 0.0
        %1367 = vmatpush1.msra.mxu0 0.0
        %1368 = vmatprep.subr.mxu0 0.0
        %1369 = vmatpush1.msra.mxu0 0.0
        %1370 = vmatprep.subr.mxu0 0.0
        %1371 = vmatpush1.msra.mxu0 0.0
        %1372 = vmatprep.mubr.f32.mxu0 0.0
        %1373 = vmatmul.mubr.f32.gmra.mrb[0].mxu0 %v1306
        %v1374 = vpop.f32.mrb[0].mxu0
        %v1375 = vadd.f32 %v1303, %v1374
        %v1376 = vpop.f32.mrb[0].mxu0
        %1377 = vdwg.mxu0
        %v1378 = vmax.f32 %v1375, 0.0
        %v1380 = vlaneseq
        %v1381 = vshrl.u32 %v1380, 7
        %v1382 = vsub.s32 0, %v1381
        %v1383 = vrot.slane %v273, %v1382
        %1385 = vmatprep.subr.mxu0 0.0
        %1386 = vmatpush1.xpose.msra.mxu0 %v298
        %1387 = vmatprep.subr.mxu0 0.0
        %1388 = vmatpush1.xpose.msra.mxu0 %v299
        %1389 = vmatprep.subr.mxu0 0.0
        %1390 = vmatpush1.xpose.msra.mxu0 %v300
        %1391 = vmatprep.subr.mxu0 0.0
        %1392 = vmatpush1.xpose.msra.mxu0 %v301
        %1393 = vmatprep.subr.mxu0 0.0
        %1394 = vmatpush1.xpose.msra.mxu0 0.0
        %1395 = vmatprep.subr.mxu0 0.0
        %1396 = vmatpush1.xpose.msra.mxu0 0.0
        %1397 = vmatprep.subr.mxu0 0.0
        %1398 = vmatpush1.xpose.msra.mxu0 0.0
        %1399 = vmatprep.subr.mxu0 0.0
        %1400 = vmatpush1.xpose.msra.mxu0 0.0
        %1401 = vmatprep.subr.mxu0 0.0
        %1402 = vmatpush1.xpose.msra.mxu0 0.0
        %1403 = vmatprep.subr.mxu0 0.0
        %1404 = vmatpush1.xpose.msra.mxu0 0.0
        %1405 = vmatprep.subr.mxu0 0.0
        %1406 = vmatpush1.xpose.msra.mxu0 0.0
        %1407 = vmatprep.subr.mxu0 0.0
        %1408 = vmatpush1.xpose.msra.mxu0 0.0
        %1409 = vmatprep.subr.mxu0 0.0
        %1410 = vmatpush1.xpose.msra.mxu0 0.0
        %1411 = vmatprep.subr.mxu0 0.0
        %1412 = vmatpush1.xpose.msra.mxu0 0.0
        %1413 = vmatprep.subr.mxu0 0.0
        %1414 = vmatpush1.xpose.msra.mxu0 0.0
        %1415 = vmatprep.subr.mxu0 0.0
        %1416 = vmatpush1.xpose.msra.mxu0 0.0
        %1417 = vmatprep.subr.mxu0 0.0
        %1418 = vmatpush1.xpose.msra.mxu0 0.0
        %1419 = vmatprep.subr.mxu0 0.0
        %1420 = vmatpush1.xpose.msra.mxu0 0.0
        %1421 = vmatprep.subr.mxu0 0.0
        %1422 = vmatpush1.xpose.msra.mxu0 0.0
        %1423 = vmatprep.subr.mxu0 0.0
        %1424 = vmatpush1.xpose.msra.mxu0 0.0
        %1425 = vmatprep.subr.mxu0 0.0
        %1426 = vmatpush1.xpose.msra.mxu0 0.0
        %1427 = vmatprep.subr.mxu0 0.0
        %1428 = vmatpush1.xpose.msra.mxu0 0.0
        %1429 = vmatprep.subr.mxu0 0.0
        %1430 = vmatpush1.xpose.msra.mxu0 0.0
        %1431 = vmatprep.subr.mxu0 0.0
        %1432 = vmatpush1.xpose.msra.mxu0 0.0
        %1433 = vmatprep.subr.mxu0 0.0
        %1434 = vmatpush1.xpose.msra.mxu0 0.0
        %1435 = vmatprep.subr.mxu0 0.0
        %1436 = vmatpush1.xpose.msra.mxu0 0.0
        %1437 = vmatprep.subr.mxu0 0.0
        %1438 = vmatpush1.xpose.msra.mxu0 0.0
        %1439 = vmatprep.subr.mxu0 0.0
        %1440 = vmatpush1.xpose.msra.mxu0 0.0
        %1441 = vmatprep.subr.mxu0 0.0
        %1442 = vmatpush1.xpose.msra.mxu0 0.0
        %1443 = vmatprep.subr.mxu0 0.0
        %1444 = vmatpush1.xpose.msra.mxu0 0.0
        %1445 = vmatprep.subr.mxu0 0.0
        %1446 = vmatpush1.xpose.msra.mxu0 0.0
        %1447 = vmatprep.subr.mxu0 0.0
        %1448 = vmatpush1.xpose.msra.mxu0 0.0
        %1449 = vmatprep.mubr.f32.mxu0 0.0
        %1450 = vmatmul.mubr.f32.gmra.mrb[0].mxu0 %v1378
        %v1451 = vpop.f32.mrb[0].mxu0
        %v1452 = vadd.f32 %v1383, %v1451
        %v1453 = vpop.f32.mrb[0].mxu0
        %1454 = vdwg.mxu0
        %v1455 = vadd.f32 %v1298, %v1452
        %v1456 = vsel %vm321, %v1455, 0.0
        %1457 = vadd.xlane.f32.xlu0 %v1456
        %v1458 = vpop.xlane.xlu0 %1457
        %v1459 = vmul.f32 %v1458, %v1280
        %v1460 = vsub.f32 %v1455, %v1459
        %v1461 = vmul.f32 %v1460, %v1460
        %v1462 = vsel %vm321, %v1461, 0.0
        %1463 = vadd.xlane.f32.xlu0 %v1462
        %v1464 = vpop.xlane.xlu0 %1463
        %v1465 = vmul.f32 %v1464, %v1280
        %v1466 = vadd.f32 %v1465, 1e-05
        %v1467 = vrsqrt.pop %v1466
        %v1468 = vmul.f32 %v1460, %v1467
        %1469 = vrot.lane.b32.xlu0 %v1270, 32
        %v1470 = vpop.permute.xlu0 %1469
        %v1472 = vmul.f32 %v1468, %v1470
        %v1474 = vlaneseq
        %v1475 = vshrl.u32 %v1474, 7
        %v1476 = vsub.s32 0, %v1475
        %v1477 = vrot.slane %v304, %v1476
        %v1479 = vadd.f32 %v1472, %v1477
        %1480 = vst.msk [vmem:[%s257] sm:$0xff] %vm321, %v1479
        %s1481 = sand.u32 %s147, 1
        %s1482 = scalar_lea.sflag [#allocation3], %s1481
        %s1483 = sand.u32 %s147, 1
        %s1484 = smul.addr %s1483, 8
        %s1485 = scalar_lea.vmem [#allocation2], %s1484
        %s1486 = sand.u32 %s173, 1
        %s1487 = scalar_lea.sflag [#allocation5], %s1486
        %s1488 = sand.u32 %s173, 1
        %s1489 = smul.addr %s1488, 32
        %s1490 = scalar_lea.vmem [#allocation4], %s1489
        // Predicated region
        $region41: #{tpu_custom_call.1} parent=39 // pred_check
          %p1491 = pneg %p157
        $region42: #{tpu_custom_call.1} parent=39 // pred_check_branch
          %1493 = sbr.rel (%p1491) target = $region44
        $region43: #{tpu_custom_call.1} parent=39 // pred_region
          %s1495 = ssub.s32 128, 128
          %1496 = vsyncadd %s1482, %s1495
          %s1497 = smul.addr %s24, 128
          %s1498 = scalar_lea.hbm %s5, %s1497
          %s1500 = sshll.u32 %s1485, 4
          %s1501 = int_to_ptr.vmem [resolvable:$true] %s1500
          %1503 = dma.vmem_to_hbm [thread:$0]  %s1501, 128, %s1498, %s1482
        $region44: #{tpu_custom_call.1} parent=39 // pred_fallthru
          _
        // Predicated region
        $region45: #{tpu_custom_call.1} parent=39 // pred_check
          %p1504 = pneg %p183
        $region46: #{tpu_custom_call.1} parent=39 // pred_check_branch
          %1506 = sbr.rel (%p1504) target = $region48
        $region47: #{tpu_custom_call.1} parent=39 // pred_region
          %s1508 = ssub.s32 512, 512
          %1509 = vsyncadd %s1487, %s1508
          %s1510 = smul.addr %s24, 4
          %s1511 = smul.addr %s1510, 128
          %s1512 = scalar_lea.hbm %s6, %s1511
          %s1513 = sshll.u32 %s1490, 4
          %s1514 = int_to_ptr.vmem [resolvable:$true] %s1513
          %1519 = dma.vmem_to_hbm [thread:$0]  %s1514, 512, %s1512, %s1487, 128, 128, 8
        $region48: #{tpu_custom_call.1} parent=39 // pred_fallthru
          _
      $region40: #{tpu_custom_call.1} parent=5 // pred_fallthru
        _
      %p1520 = scmp.le.s32.totalorder 2, %s19
      // Predicated region
      $region49: #{tpu_custom_call.1} parent=5 // pred_check
        %p1521 = pneg %p1520
      $region50: #{tpu_custom_call.1} parent=5 // pred_check_branch
        %1523 = sbr.rel (%p1521) target = $region52
      $region51: #{tpu_custom_call.1} parent=5 // pred_region
        %s1524 = ssub.s32 %s19, 2
        // Predicated region
        $region53: #{tpu_custom_call.1} parent=51 // pred_check
          %p1525 = pneg %p163
        $region54: #{tpu_custom_call.1} parent=51 // pred_check_branch
          %1527 = sbr.rel (%p1525) target = $region56
        $region55: #{tpu_custom_call.1} parent=51 // pred_region
          %s1528 = sand.u32 %s148, 1
          %s1529 = scalar_lea.sflag [#allocation3], %s1528
          %s1530 = sand.u32 %s148, 1
          %s1531 = smul.addr %s1530, 8
          %s1532 = scalar_lea.vmem [#allocation2], %s1531
          %1533 = dma.done %s1529, 128
        $region56: #{tpu_custom_call.1} parent=51 // pred_fallthru
          _
        // Predicated region
        $region57: #{tpu_custom_call.1} parent=51 // pred_check
          %p1534 = pneg %p189
        $region58: #{tpu_custom_call.1} parent=51 // pred_check_branch
          %1536 = sbr.rel (%p1534) target = $region60
        $region59: #{tpu_custom_call.1} parent=51 // pred_region
          %s1537 = sand.u32 %s174, 1
          %s1538 = scalar_lea.sflag [#allocation5], %s1537
          %s1539 = sand.u32 %s174, 1
          %s1540 = smul.addr %s1539, 32
          %s1541 = scalar_lea.vmem [#allocation4], %s1540
          %1542 = dma.done %s1538, 512
        $region60: #{tpu_custom_call.1} parent=51 // pred_fallthru
          _
      $region52: #{tpu_custom_call.1} parent=5 // pred_fallthru
        _
    $region6: #{tpu_custom_call.1} parent=1 // loop_footer
      %s23 = sadd.s32 1, %s19
    $region7: #{tpu_custom_call.1} parent=1 // loop_footer_branch
      %18 = sbr.rel target = $region3
    $region8: #{tpu_custom_call.1} parent=1 // loop_exit
      _
    %1543 = vsyncpa [#allocation3], 1
    %s1544 = scalar_lea.sflag [#allocation3], 1
    %1545 = vsyncpa %s1544, 1
    %1546 = vsyncpa [#allocation5], 1
    %s1547 = scalar_lea.sflag [#allocation5], 1
    %1548 = vsyncpa %s1547, 1

</llo_original>
